<compile_context>
chip_gen: v7x
topology: tpu7x:2x2x1
jax: 0.10.0
libtpu: 0.0.40
codegen_flags: <defaults>
</compile_context>

<pallas_src>
import jax
import jax.numpy as jnp
from jax import lax
from jax.experimental import pallas as pl
from jax.experimental.pallas import tpu as pltpu

HIDDEN = 32
FFN = 128
VOCAB = 100
MAX_SEQ = 64
VOCAB_PAD = ((VOCAB + 7) // 8) * 8          # sublane-aligned one-hot width


def _vmem():
    return pl.BlockSpec(memory_space=pltpu.MemorySpace.VMEM)


def _smem():
    return pl.BlockSpec(memory_space=pltpu.MemorySpace.SMEM)


def _layernorm(x, g, b, eps=1e-12):
    mu = jnp.mean(x, axis=-1, keepdims=True)
    var = jnp.mean((x - mu) ** 2, axis=-1, keepdims=True)
    return (x - mu) * lax.rsqrt(var + eps) * g + b


def _lse2(x, y):
    m = jnp.maximum(x, y)
    return m + jnp.log(jnp.exp(x - m) + jnp.exp(y - m))


# ----------------------------------------------------------------------------
# Single fused Pallas kernel:
#   embedding gather -> emb-LN -> QKV -> batched attention -> out-proj -> LN1
#   -> FFN -> LN2 -> QA head -> CRF NLL
# ----------------------------------------------------------------------------
def _fused_forward_call(B, S, H):
    scale = 1.0 / (H ** 0.5)
    f32 = jnp.float32
    VP = VOCAB_PAD
    FF = FFN

    def kernel(tok_ref,        # (B*S, 2) int32 : col0 = input_ids, col1 = token_type_ids
               mask_ref,       # (B, S)   int32 : attention_mask (single layout shipped)
               spep_ref,       # (2, B)   int32 : row0 = start_positions, row1 = end_positions
               emb_ref,        # (VP+MAX_SEQ+2, H) f32 : [tok_emb(pad) ; pos_emb ; type_emb]
               wpack_ref,      # (H+1, 4H+FFN) f32 : [w_qkv|wo|w1 ; b_qkv|bo|b1]
               w2pack_ref,     # (FFN+1, H) f32 : [w2 ; b2]
               vec_ref,        # (8, H) f32 : ln_emb_g/b, ln1_g/b, ln2_g/b, w_qa^T rows
               crf_ref,        # SMEM (10,) f32 : [s0,s1,e0,e1,t00,t01,t10,t11,bqa0,bqa1]
               loss_ref):      # (1, 1) f32 output
        vec = vec_ref[...]
        wall = wpack_ref[...]
        w2all = w2pack_ref[...]
        embp = emb_ref[...]

        # ---------- in-kernel embedding gather (one-hot MXU matmul) ----------
        ids = tok_ref[:, 0:1]                                         # (B*S, 1) i32
        ttf = tok_ref[:, 1:2].astype(f32)                             # (B*S, 1)
        onehot = (ids == lax.broadcasted_iota(jnp.int32, (B * S, VP), 1)).astype(f32)
        tok_e = jnp.dot(onehot, embp[0:VP, :], preferred_element_type=f32)   # (B*S, H)
        pos_e = jnp.concatenate([embp[VP:VP + S, :]] * B, axis=0)            # (B*S, H)
        t0 = embp[VP + MAX_SEQ:VP + MAX_SEQ + 1, :]                          # (1, H)
        t1 = embp[VP + MAX_SEQ + 1:VP + MAX_SEQ + 2, :]
        typ_e = t0 + ttf * (t1 - t0)                                         # token_type in {0,1}
        x0 = _layernorm(tok_e + pos_e + typ_e, vec[0:1, :], vec[1:2, :])     # (B*S, H)

        # ---------- fused QKV projection (one lane-dense MXU matmul) ---------
        w_qkv = wall[0:H, 0:3 * H]
        b_qkv = wall[H:H + 1, 0:3 * H]
        qkv = jnp.dot(x0, w_qkv, preferred_element_type=f32) + b_qkv         # (B*S, 3H)
        q3 = qkv[:, 0 * H:1 * H].reshape(B, S, H)
        k3 = qkv[:, 1 * H:2 * H].reshape(B, S, H)
        v3 = qkv[:, 2 * H:3 * H].reshape(B, S, H)

        # ---------- single-head self-attention, ONE batched contraction ------
        mask_f = mask_ref[...].astype(f32)                                   # (B, S)
        bias2 = (1.0 - mask_f) * (-1e9)                                      # hoisted, computed once
        b_idx = lax.broadcasted_iota(jnp.int32, (B, S, S), 0)
        bias3 = jnp.zeros((B, S, S), f32)
        for b in range(B):                                                   # layout build, no scratch
            bias3 = jnp.where(b_idx == b, bias2[b:b + 1, :], bias3)          # (1,S) -> key axis
        s = jnp.einsum('bqd,bkd->bqk', q3, k3,
                       preferred_element_type=f32) * scale + bias3           # (B, S, S)
        s = s - jnp.max(s, axis=-1, keepdims=True)
        p_att = jnp.exp(s)
        p_att = p_att * pl.reciprocal(jnp.sum(p_att, axis=-1, keepdims=True), approx=True)
        ctx = jnp.einsum('bqk,bkd->bqd', p_att, v3,
                         preferred_element_type=f32).reshape(B * S, H)       # (B*S, H)

        wo = wall[0:H, 3 * H:4 * H]
        bo = wall[H:H + 1, 3 * H:4 * H]
        attn = jnp.dot(ctx, wo, preferred_element_type=f32) + bo
        x1 = _layernorm(x0 + attn, vec[2:3, :], vec[3:4, :])

        # ---------- feed-forward ---------------------------------------------
        w1 = wall[0:H, 4 * H:4 * H + FF]
        b1 = wall[H:H + 1, 4 * H:4 * H + FF]
        ff = jnp.dot(x1, w1, preferred_element_type=f32) + b1
        # TODO(synk): HF BERT uses exact erf GELU; tanh approximation kept (EUP-friendly).
        ff = jax.nn.gelu(ff, approximate=True)
        ff = jnp.dot(ff, w2all[0:FF, :], preferred_element_type=f32) + w2all[FF:FF + 1, :]
        x2 = _layernorm(x1 + ff, vec[4:5, :], vec[5:6, :])

        # ---------- QA head -> CRF emissions, re-laid (S, B) in registers ----
        qa_rows = vec[6:8, :]                                                # (2, H) = w_qa^T
        logits = lax.dot_general(x2, qa_rows, (((1,), (1,)), ((), ())),
                                 preferred_element_type=f32)                 # (B*S, 2)
        lane_b = lax.broadcasted_iota(jnp.int32, (S, B), 1)
        em0 = jnp.zeros((S, B), f32)
        em1 = jnp.zeros((S, B), f32)
        for b in range(B):                                                   # in-register select, no vst
            blk = logits[b * S:(b + 1) * S, :]                               # (S, 2)
            em0 = jnp.where(lane_b == b, blk[:, 0:1], em0)
            em1 = jnp.where(lane_b == b, blk[:, 1:2], em1)
        em0 = em0 + crf_ref[8]                                               # + b_qa[start]
        em1 = em1 + crf_ref[9]                                               # + b_qa[end]

        # (S, B) CRF mask derived in-kernel from the single (B, S) mask input
        # via an MXU identity transpose (MXU is otherwise idle here).
        eye_s = (lax.broadcasted_iota(jnp.int32, (S, S), 0) ==
                 lax.broadcasted_iota(jnp.int32, (S, S), 1)).astype(f32)
        mk = lax.dot_general(eye_s, mask_f, (((1,), (1,)), ((), ())),
                             preferred_element_type=f32)                     # (S, B)

        # ---------- span labels built in-kernel from start/end positions -----
        sp = spep_ref[0:1, :]                                                # (1, B) i32
        ep = spep_ref[1:2, :]
        pos_sb = lax.broadcasted_iota(jnp.int32, (S, B), 0)
        valid = (sp >= 0) & (sp < S) & (ep >= 0) & (ep < S) & (sp <= ep)
        labels = jnp.where(valid & (pos_sb >= sp) & (pos_sb <= ep), 1, 0).astype(jnp.int32)

        # ---------- CRF negative log-likelihood (torchcrf, reduction='sum') --
        # transition / boundary scalars hoisted to (1, B) vectors ONCE.
        s0v = jnp.full((1, B), crf_ref[0], f32)
        s1v = jnp.full((1, B), crf_ref[1], f32)
        end0v = jnp.full((1, B), crf_ref[2], f32)
        end1v = jnp.full((1, B), crf_ref[3], f32)
        t00v = jnp.full((1, B), crf_ref[4], f32)
        t01v = jnp.full((1, B), crf_ref[5], f32)
        t10v = jnp.full((1, B), crf_ref[6], f32)
        t11v = jnp.full((1, B), crf_ref[7], f32)

        e00 = em0[0:1, :]
        e10 = em1[0:1, :]
        lab0 = labels[0:1, :]
        a0 = e00 + s0v                                       # log-Z recursion state, (1, B)
        a1 = e10 + s1v
        score = jnp.where(lab0 == 1, a1, a0)                 # gold-path score, (1, B)
        prev = lab0
        last = lab0
        # S is tiny & static -> full unroll.
        # TODO(synk): switch to lax.fori_loop(..., unroll=4/8) with a stacked carry
        #             once S grows toward MAX_SEQ (full unroll inflates vreg pressure).
        for t in range(1, S):
            et0 = em0[t:t + 1, :]
            et1 = em1[t:t + 1, :]
            mt = mk[t:t + 1, :]
            lt = labels[t:t + 1, :]
            n0 = _lse2(a0 + t00v, a1 + t10v) + et0
            n1 = _lse2(a0 + t01v, a1 + t11v) + et1
            keep = mt > 0.0
            a0 = jnp.where(keep, n0, a0)
            a1 = jnp.where(keep, n1, a1)
            trans_sc = jnp.where(prev == 1,
                                 jnp.where(lt == 1, t11v, t10v),
                                 jnp.where(lt == 1, t01v, t00v))
            emis_sc = jnp.where(lt == 1, et1, et0)
            score = score + (trans_sc + emis_sc) * mt
            prev = lt
            last = jnp.where(keep, lt, last)

        score = score + jnp.where(last == 1, end1v, end0v)
        log_z = _lse2(a0 + end0v, a1 + end1v)                # (1, B)
        loss_ref[...] = jnp.sum(log_z - score, keepdims=True)  # (1, 1)

    return pl.pallas_call(
        kernel,
        out_shape=jax.ShapeDtypeStruct((1, 1), jnp.float32),
        in_specs=[_vmem()] * 7 + [_smem()],
        out_specs=_vmem(),
    )


# ----------------------------------------------------------------------------
# Parameters (packed once at init) + forward wrapper (minimal per-call glue)
# ----------------------------------------------------------------------------
def init_params(key, vocab=VOCAB, hidden=HIDDEN, ffn=FFN,
                max_seq=MAX_SEQ, num_types=2):
    ks = jax.random.split(key, 13)

    def n(k, shape, scl=0.02):
        return (scl * jax.random.normal(k, shape)).astype(jnp.float32)

    z = lambda *s: jnp.zeros(s, jnp.float32)
    o = lambda *s: jnp.ones(s, jnp.float32)

    tok = n(ks[0], (vocab, hidden))
    pos = n(ks[1], (max_seq, hidden))
    typ = n(ks[2], (num_types, hidden))
    emb_pack = jnp.concatenate(
        [tok, jnp.zeros((VOCAB_PAD - vocab, hidden), jnp.float32), pos, typ], axis=0)

    wq, wk, wv = (n(ks[3], (hidden, hidden)), n(ks[4], (hidden, hidden)),
                  n(ks[5], (hidden, hidden)))
    w_qkv = jnp.concatenate([wq, wk, wv], axis=1)            # (H, 3H)
    wo = n(ks[6], (hidden, hidden))
    w1 = n(ks[7], (hidden, ffn))
    w2 = n(ks[8], (ffn, hidden))
    b_qkv, bo, b1, b2 = z(1, 3 * hidden), z(1, hidden), z(1, ffn), z(1, hidden)

    # [w_qkv | wo | w1] with the matching biases as one extra bottom row.
    w_pack = jnp.concatenate(
        [jnp.concatenate([w_qkv, wo, w1], axis=1),
         jnp.concatenate([b_qkv, bo, b1], axis=1)], axis=0)  # (H+1, 4H+FFN)
    w2_pack = jnp.concatenate([w2, b2], axis=0)              # (FFN+1, H)

    w_qa = n(ks[9], (hidden, 2))
    b_qa = z(2)
    vec_pack = jnp.concatenate([
        o(1, hidden), z(1, hidden),        # ln_emb  gamma / beta
        o(1, hidden), z(1, hidden),        # ln1     gamma / beta
        o(1, hidden), z(1, hidden),        # ln2     gamma / beta
        w_qa[:, 0:1].T, w_qa[:, 1:2].T,    # QA head weight columns as rows
    ], axis=0)                             # (8, H)

    # CRF params packed for SMEM scalar access:
    # [start0, start1, end0, end1, t00, t01, t10, t11, b_qa0, b_qa1]
    crf = jnp.concatenate([n(ks[10], (2,), 0.1),
                           n(ks[11], (2,), 0.1),
                           n(ks[12], (2, 2), 0.1).reshape(-1),
                           b_qa])

    return {"emb_pack": emb_pack, "w_pack": w_pack, "w2_pack": w2_pack,
            "vec_pack": vec_pack, "crf_params": crf}


def spanbert_crf_forward(p, input_ids, attention_mask, token_type_ids,
                         start_positions=None, end_positions=None):
    B, S = input_ids.shape
    assert S <= MAX_SEQ

    if start_positions is None and end_positions is None:
        # TODO(synk): CRF.decode inference branch (Viterbi backtracking that
        # returns ragged Python lists) is not implemented here.
        raise NotImplementedError("only the loss branch is implemented")

    # Only layout plumbing remains in the wrapper (two tiny stacks).
    tok_info = jnp.stack([input_ids.reshape(-1).astype(jnp.int32),
                          token_type_ids.reshape(-1).astype(jnp.int32)], axis=1)  # (B*S, 2)
    spep = jnp.stack([start_positions, end_positions]).astype(jnp.int32)          # (2, B)

    loss = _fused_forward_call(B, S, HIDDEN)(
        tok_info, attention_mask.astype(jnp.int32), spep,
        p["emb_pack"], p["w_pack"], p["w2_pack"], p["vec_pack"], p["crf_params"])
    return {"loss": loss[0, 0]}


if __name__ == "__main__":
    key = jax.random.PRNGKey(0)
    pkey, ikey = jax.random.split(key)
    params = init_params(pkey)

    B, S = 2, 8
    input_ids = jax.random.randint(ikey, (B, S), 0, VOCAB, dtype=jnp.int32)
    attention_mask = jnp.array([[1, 1, 1, 1, 1, 1, 1, 1],
                                [1, 1, 1, 1, 1, 1, 0, 0]], dtype=jnp.int32)
    token_type_ids = jnp.array([[0, 0, 0, 1, 1, 1, 1, 1],
                                [0, 0, 0, 0, 1, 1, 0, 0]], dtype=jnp.int32)
    start_positions = jnp.array([1, 2], dtype=jnp.int32)
    end_positions = jnp.array([3, 4], dtype=jnp.int32)

    fwd = jax.jit(spanbert_crf_forward)
    out = fwd(params, input_ids, attention_mask, token_type_ids,
              start_positions, end_positions)
    loss = jax.block_until_ready(out["loss"])
    assert bool(jnp.isfinite(loss))
    print("KERNEL_OK")
</pallas_src>

<mosaic_0001>
module attributes {stable_mosaic.version = 11 : i64} {
  func.func @kernel(%arg0: memref<16x2xi32, #tpu.memory_space<vmem>>, %arg1: memref<2x8xi32, #tpu.memory_space<vmem>>, %arg2: memref<2x2xi32, #tpu.memory_space<vmem>>, %arg3: memref<170x32xf32, #tpu.memory_space<vmem>>, %arg4: memref<33x256xf32, #tpu.memory_space<vmem>>, %arg5: memref<129x32xf32, #tpu.memory_space<vmem>>, %arg6: memref<8x32xf32, #tpu.memory_space<vmem>>, %arg7: memref<10xf32, #tpu.memory_space<smem>>, %arg8: memref<1x1xf32, #tpu.memory_space<vmem>>) attributes {dimension_semantics = [], scalar_prefetch = 0 : i64, scratch_operands = 0 : i64, tpu.core_type = #tpu.core_type<tc>} {
    %c0 = arith.constant 0 : index
    %c0_0 = arith.constant 0 : index
    %0 = vector.load %arg6[%c0, %c0_0] : memref<8x32xf32, #tpu.memory_space<vmem>>, vector<8x32xf32>
    %c0_1 = arith.constant 0 : index
    %c0_2 = arith.constant 0 : index
    %1 = vector.load %arg4[%c0_1, %c0_2] : memref<33x256xf32, #tpu.memory_space<vmem>>, vector<33x256xf32>
    %c0_3 = arith.constant 0 : index
    %c0_4 = arith.constant 0 : index
    %2 = vector.load %arg5[%c0_3, %c0_4] : memref<129x32xf32, #tpu.memory_space<vmem>>, vector<129x32xf32>
    %c0_5 = arith.constant 0 : index
    %c0_6 = arith.constant 0 : index
    %3 = vector.load %arg3[%c0_5, %c0_6] : memref<170x32xf32, #tpu.memory_space<vmem>>, vector<170x32xf32>
    %c0_7 = arith.constant 0 : index
    %c0_8 = arith.constant 0 : index
    %4 = vector.load %arg0[%c0_7, %c0_8] : memref<16x2xi32, #tpu.memory_space<vmem>>, vector<16x1xi32>
    %c0_9 = arith.constant 0 : index
    %c1 = arith.constant 1 : index
    %5 = vector.load %arg0[%c0_9, %c1] : memref<16x2xi32, #tpu.memory_space<vmem>>, vector<16x1xi32>
    %6 = arith.sitofp %5 : vector<16x1xi32> to vector<16x1xf32>
    %7 = tpu.iota {dimensions = array<i32: 1>} : vector<16x104xi32>
    %8 = vector.broadcast %4 : vector<16x1xi32> to vector<16x104xi32>
    %9 = arith.cmpi eq, %8, %7 : vector<16x104xi32>
    %10 = arith.extui %9 : vector<16x104xi1> to vector<16x104xi32>
    %11 = arith.sitofp %10 : vector<16x104xi32> to vector<16x104xf32>
    %12 = vector.extract_strided_slice %3 {offsets = [0, 0], sizes = [104, 32], strides = [1, 1]} : vector<170x32xf32> to vector<104x32xf32>
    %cst = arith.constant dense<0.000000e+00> : vector<16x32xf32>
    %13 = tpu.matmul %11, %12, %cst {dimension_numbers = #tpu.dot_dimension_numbers<[1], [0], [0], [1], [0, 0, 1, 1], [], []>} : vector<16x104xf32>, vector<104x32xf32>, vector<16x32xf32> -> vector<16x32xf32>
    %14 = vector.extract_strided_slice %3 {offsets = [104, 0], sizes = [8, 32], strides = [1, 1]} : vector<170x32xf32> to vector<8x32xf32>
    %15 = tpu.concatenate %14, %14 in 0 : vector<8x32xf32>, vector<8x32xf32> -> vector<16x32xf32>
    %16 = vector.extract_strided_slice %3 {offsets = [168, 0], sizes = [1, 32], strides = [1, 1]} : vector<170x32xf32> to vector<1x32xf32>
    %17 = vector.extract_strided_slice %3 {offsets = [169, 0], sizes = [1, 32], strides = [1, 1]} : vector<170x32xf32> to vector<1x32xf32>
    %18 = arith.subf %17, %16 : vector<1x32xf32>
    %19 = vector.broadcast %6 : vector<16x1xf32> to vector<16x32xf32>
    %20 = vector.broadcast %18 : vector<1x32xf32> to vector<16x32xf32>
    %21 = arith.mulf %19, %20 : vector<16x32xf32>
    %22 = vector.broadcast %16 : vector<1x32xf32> to vector<16x32xf32>
    %23 = arith.addf %22, %21 : vector<16x32xf32>
    %24 = arith.addf %13, %15 : vector<16x32xf32>
    %25 = arith.addf %24, %23 : vector<16x32xf32>
    %26 = vector.extract_strided_slice %0 {offsets = [0, 0], sizes = [1, 32], strides = [1, 1]} : vector<8x32xf32> to vector<1x32xf32>
    %27 = vector.extract_strided_slice %0 {offsets = [1, 0], sizes = [1, 32], strides = [1, 1]} : vector<8x32xf32> to vector<1x32xf32>
    %cst_10 = arith.constant dense<0.000000e+00> : vector<16xf32>
    %28 = vector.multi_reduction <add>, %25, %cst_10 [1] : vector<16x32xf32> to vector<16xf32>
    %29 = vector.shape_cast %28 : vector<16xf32> to vector<16x1xf32>
    %cst_11 = arith.constant 3.200000e+01 : f32
    %30 = vector.broadcast %cst_11 : f32 to vector<16x1xf32>
    %31 = arith.divf %29, %30 : vector<16x1xf32>
    %32 = vector.broadcast %31 : vector<16x1xf32> to vector<16x32xf32>
    %33 = arith.subf %25, %32 : vector<16x32xf32>
    %34 = arith.mulf %33, %33 : vector<16x32xf32>
    %cst_12 = arith.constant dense<0.000000e+00> : vector<16xf32>
    %35 = vector.multi_reduction <add>, %34, %cst_12 [1] : vector<16x32xf32> to vector<16xf32>
    %36 = vector.shape_cast %35 : vector<16xf32> to vector<16x1xf32>
    %cst_13 = arith.constant 3.200000e+01 : f32
    %37 = vector.broadcast %cst_13 : f32 to vector<16x1xf32>
    %38 = arith.divf %36, %37 : vector<16x1xf32>
    %39 = vector.broadcast %31 : vector<16x1xf32> to vector<16x32xf32>
    %40 = arith.subf %25, %39 : vector<16x32xf32>
    %cst_14 = arith.constant 9.99999996E-13 : f32
    %41 = vector.broadcast %cst_14 : f32 to vector<16x1xf32>
    %42 = arith.addf %38, %41 : vector<16x1xf32>
    %43 = math.rsqrt %42 : vector<16x1xf32>
    %44 = vector.broadcast %43 : vector<16x1xf32> to vector<16x32xf32>
    %45 = arith.mulf %40, %44 : vector<16x32xf32>
    %46 = vector.broadcast %26 : vector<1x32xf32> to vector<16x32xf32>
    %47 = arith.mulf %45, %46 : vector<16x32xf32>
    %48 = vector.broadcast %27 : vector<1x32xf32> to vector<16x32xf32>
    %49 = arith.addf %47, %48 : vector<16x32xf32>
    %50 = vector.extract_strided_slice %1 {offsets = [0, 0], sizes = [32, 96], strides = [1, 1]} : vector<33x256xf32> to vector<32x96xf32>
    %51 = vector.extract_strided_slice %1 {offsets = [32, 0], sizes = [1, 96], strides = [1, 1]} : vector<33x256xf32> to vector<1x96xf32>
    %cst_15 = arith.constant dense<0.000000e+00> : vector<16x96xf32>
    %52 = tpu.matmul %49, %50, %cst_15 {dimension_numbers = #tpu.dot_dimension_numbers<[1], [0], [0], [1], [0, 0, 1, 1], [], []>} : vector<16x32xf32>, vector<32x96xf32>, vector<16x96xf32> -> vector<16x96xf32>
    %53 = vector.broadcast %51 : vector<1x96xf32> to vector<16x96xf32>
    %54 = arith.addf %52, %53 : vector<16x96xf32>
    %55 = vector.extract_strided_slice %54 {offsets = [0, 0], sizes = [16, 32], strides = [1, 1]} : vector<16x96xf32> to vector<16x32xf32>
    %56 = vector.shape_cast %55 : vector<16x32xf32> to vector<2x8x32xf32>
    %57 = vector.extract_strided_slice %54 {offsets = [0, 32], sizes = [16, 32], strides = [1, 1]} : vector<16x96xf32> to vector<16x32xf32>
    %58 = vector.shape_cast %57 : vector<16x32xf32> to vector<2x8x32xf32>
    %59 = vector.extract_strided_slice %54 {offsets = [0, 64], sizes = [16, 32], strides = [1, 1]} : vector<16x96xf32> to vector<16x32xf32>
    %60 = vector.shape_cast %59 : vector<16x32xf32> to vector<2x8x32xf32>
    %c0_16 = arith.constant 0 : index
    %c0_17 = arith.constant 0 : index
    %61 = vector.load %arg1[%c0_16, %c0_17] : memref<2x8xi32, #tpu.memory_space<vmem>>, vector<2x8xi32>
    %62 = arith.sitofp %61 : vector<2x8xi32> to vector<2x8xf32>
    %cst_18 = arith.constant 1.000000e+00 : f32
    %63 = vector.broadcast %cst_18 : f32 to vector<2x8xf32>
    %64 = arith.subf %63, %62 : vector<2x8xf32>
    %cst_19 = arith.constant -1.000000e+09 : f32
    %65 = vector.broadcast %cst_19 : f32 to vector<2x8xf32>
    %66 = arith.mulf %64, %65 : vector<2x8xf32>
    %67 = tpu.iota {dimensions = array<i32: 0>} : vector<2x8x8xi32>
    %cst_20 = arith.constant 0.000000e+00 : f32
    %68 = vector.broadcast %cst_20 : f32 to vector<2x8x8xf32>
    %c0_i32 = arith.constant 0 : i32
    %69 = vector.broadcast %c0_i32 : i32 to vector<2x8x8xi32>
    %70 = arith.cmpi eq, %67, %69 : vector<2x8x8xi32>
    %71 = vector.extract_strided_slice %66 {offsets = [0, 0], sizes = [1, 8], strides = [1, 1]} : vector<2x8xf32> to vector<1x8xf32>
    %72 = vector.shape_cast %71 : vector<1x8xf32> to vector<1x1x8xf32>
    %73 = vector.broadcast %72 : vector<1x1x8xf32> to vector<2x8x8xf32>
    %74 = arith.select %70, %73, %68 : vector<2x8x8xi1>, vector<2x8x8xf32>
    %c1_i32 = arith.constant 1 : i32
    %75 = vector.broadcast %c1_i32 : i32 to vector<2x8x8xi32>
    %76 = arith.cmpi eq, %67, %75 : vector<2x8x8xi32>
    %77 = vector.extract_strided_slice %66 {offsets = [1, 0], sizes = [1, 8], strides = [1, 1]} : vector<2x8xf32> to vector<1x8xf32>
    %78 = vector.shape_cast %77 : vector<1x8xf32> to vector<1x1x8xf32>
    %79 = vector.broadcast %78 : vector<1x1x8xf32> to vector<2x8x8xf32>
    %80 = arith.select %76, %79, %74 : vector<2x8x8xi1>, vector<2x8x8xf32>
    "tpu.trace_start"() <{level = 10 : i32, message = "bqd,bkd->bqk"}> : () -> ()
    %cst_21 = arith.constant dense<0.000000e+00> : vector<2x8x8xf32>
    %81 = tpu.matmul %56, %58, %cst_21 {dimension_numbers = #tpu.dot_dimension_numbers<[2], [2], [1], [1], [0, 0, 0, 1, 1, 1], [0], [0]>} : vector<2x8x32xf32>, vector<2x8x32xf32>, vector<2x8x8xf32> -> vector<2x8x8xf32>
    "tpu.trace_stop"() : () -> ()
    %cst_22 = arith.constant 0.176776692 : f32
    %82 = vector.broadcast %cst_22 : f32 to vector<2x8x8xf32>
    %83 = arith.mulf %81, %82 : vector<2x8x8xf32>
    %84 = arith.addf %83, %80 : vector<2x8x8xf32>
    %cst_23 = arith.constant dense<0xFF800000> : vector<2x8xf32>
    %85 = vector.multi_reduction <maximumf>, %84, %cst_23 [2] : vector<2x8x8xf32> to vector<2x8xf32>
    %86 = vector.shape_cast %85 : vector<2x8xf32> to vector<2x8x1xf32>
    %87 = vector.broadcast %86 : vector<2x8x1xf32> to vector<2x8x8xf32>
    %88 = arith.subf %84, %87 : vector<2x8x8xf32>
    %89 = math.exp %88 : vector<2x8x8xf32>
    %cst_24 = arith.constant dense<0.000000e+00> : vector<2x8xf32>
    %90 = vector.multi_reduction <add>, %89, %cst_24 [2] : vector<2x8x8xf32> to vector<2x8xf32>
    %91 = vector.shape_cast %90 : vector<2x8xf32> to vector<2x8x1xf32>
    %92 = tpu.reciprocal %91 {approx = true} : vector<2x8x1xf32> -> vector<2x8x1xf32>
    %93 = vector.broadcast %92 : vector<2x8x1xf32> to vector<2x8x8xf32>
    %94 = arith.mulf %89, %93 : vector<2x8x8xf32>
    "tpu.trace_start"() <{level = 10 : i32, message = "bqk,bkd->bqd"}> : () -> ()
    %cst_25 = arith.constant dense<0.000000e+00> : vector<2x8x32xf32>
    %95 = tpu.matmul %94, %60, %cst_25 {dimension_numbers = #tpu.dot_dimension_numbers<[2], [1], [1], [2], [0, 0, 0, 1, 1, 2], [0], [0]>} : vector<2x8x8xf32>, vector<2x8x32xf32>, vector<2x8x32xf32> -> vector<2x8x32xf32>
    "tpu.trace_stop"() : () -> ()
    %96 = vector.shape_cast %95 : vector<2x8x32xf32> to vector<16x32xf32>
    %97 = vector.extract_strided_slice %1 {offsets = [0, 96], sizes = [32, 32], strides = [1, 1]} : vector<33x256xf32> to vector<32x32xf32>
    %98 = vector.extract_strided_slice %1 {offsets = [32, 96], sizes = [1, 32], strides = [1, 1]} : vector<33x256xf32> to vector<1x32xf32>
    %cst_26 = arith.constant dense<0.000000e+00> : vector<16x32xf32>
    %99 = tpu.matmul %96, %97, %cst_26 {dimension_numbers = #tpu.dot_dimension_numbers<[1], [0], [0], [1], [0, 0, 1, 1], [], []>} : vector<16x32xf32>, vector<32x32xf32>, vector<16x32xf32> -> vector<16x32xf32>
    %100 = vector.broadcast %98 : vector<1x32xf32> to vector<16x32xf32>
    %101 = arith.addf %99, %100 : vector<16x32xf32>
    %102 = arith.addf %49, %101 : vector<16x32xf32>
    %103 = vector.extract_strided_slice %0 {offsets = [2, 0], sizes = [1, 32], strides = [1, 1]} : vector<8x32xf32> to vector<1x32xf32>
    %104 = vector.extract_strided_slice %0 {offsets = [3, 0], sizes = [1, 32], strides = [1, 1]} : vector<8x32xf32> to vector<1x32xf32>
    %cst_27 = arith.constant dense<0.000000e+00> : vector<16xf32>
    %105 = vector.multi_reduction <add>, %102, %cst_27 [1] : vector<16x32xf32> to vector<16xf32>
    %106 = vector.shape_cast %105 : vector<16xf32> to vector<16x1xf32>
    %cst_28 = arith.constant 3.200000e+01 : f32
    %107 = vector.broadcast %cst_28 : f32 to vector<16x1xf32>
    %108 = arith.divf %106, %107 : vector<16x1xf32>
    %109 = vector.broadcast %108 : vector<16x1xf32> to vector<16x32xf32>
    %110 = arith.subf %102, %109 : vector<16x32xf32>
    %111 = arith.mulf %110, %110 : vector<16x32xf32>
    %cst_29 = arith.constant dense<0.000000e+00> : vector<16xf32>
    %112 = vector.multi_reduction <add>, %111, %cst_29 [1] : vector<16x32xf32> to vector<16xf32>
    %113 = vector.shape_cast %112 : vector<16xf32> to vector<16x1xf32>
    %cst_30 = arith.constant 3.200000e+01 : f32
    %114 = vector.broadcast %cst_30 : f32 to vector<16x1xf32>
    %115 = arith.divf %113, %114 : vector<16x1xf32>
    %116 = vector.broadcast %108 : vector<16x1xf32> to vector<16x32xf32>
    %117 = arith.subf %102, %116 : vector<16x32xf32>
    %cst_31 = arith.constant 9.99999996E-13 : f32
    %118 = vector.broadcast %cst_31 : f32 to vector<16x1xf32>
    %119 = arith.addf %115, %118 : vector<16x1xf32>
    %120 = math.rsqrt %119 : vector<16x1xf32>
    %121 = vector.broadcast %120 : vector<16x1xf32> to vector<16x32xf32>
    %122 = arith.mulf %117, %121 : vector<16x32xf32>
    %123 = vector.broadcast %103 : vector<1x32xf32> to vector<16x32xf32>
    %124 = arith.mulf %122, %123 : vector<16x32xf32>
    %125 = vector.broadcast %104 : vector<1x32xf32> to vector<16x32xf32>
    %126 = arith.addf %124, %125 : vector<16x32xf32>
    %127 = vector.extract_strided_slice %1 {offsets = [0, 128], sizes = [32, 128], strides = [1, 1]} : vector<33x256xf32> to vector<32x128xf32>
    %128 = vector.extract_strided_slice %1 {offsets = [32, 128], sizes = [1, 128], strides = [1, 1]} : vector<33x256xf32> to vector<1x128xf32>
    %cst_32 = arith.constant dense<0.000000e+00> : vector<16x128xf32>
    %129 = tpu.matmul %126, %127, %cst_32 {dimension_numbers = #tpu.dot_dimension_numbers<[1], [0], [0], [1], [0, 0, 1, 1], [], []>} : vector<16x32xf32>, vector<32x128xf32>, vector<16x128xf32> -> vector<16x128xf32>
    %130 = vector.broadcast %128 : vector<1x128xf32> to vector<16x128xf32>
    %131 = arith.addf %129, %130 : vector<16x128xf32>
    %132 = arith.mulf %131, %131 : vector<16x128xf32>
    %133 = arith.mulf %131, %132 : vector<16x128xf32>
    %cst_33 = arith.constant 4.471500e-02 : f32
    %134 = vector.broadcast %cst_33 : f32 to vector<16x128xf32>
    %135 = arith.mulf %134, %133 : vector<16x128xf32>
    %136 = arith.addf %131, %135 : vector<16x128xf32>
    %cst_34 = arith.constant 0.797884583 : f32
    %137 = vector.broadcast %cst_34 : f32 to vector<16x128xf32>
    %138 = arith.mulf %137, %136 : vector<16x128xf32>
    %139 = math.tanh %138 : vector<16x128xf32>
    %cst_35 = arith.constant 1.000000e+00 : f32
    %140 = vector.broadcast %cst_35 : f32 to vector<16x128xf32>
    %141 = arith.addf %140, %139 : vector<16x128xf32>
    %cst_36 = arith.constant 5.000000e-01 : f32
    %142 = vector.broadcast %cst_36 : f32 to vector<16x128xf32>
    %143 = arith.mulf %142, %141 : vector<16x128xf32>
    %144 = arith.mulf %131, %143 : vector<16x128xf32>
    %145 = vector.extract_strided_slice %2 {offsets = [0, 0], sizes = [128, 32], strides = [1, 1]} : vector<129x32xf32> to vector<128x32xf32>
    %cst_37 = arith.constant dense<0.000000e+00> : vector<16x32xf32>
    %146 = tpu.matmul %144, %145, %cst_37 {dimension_numbers = #tpu.dot_dimension_numbers<[1], [0], [0], [1], [0, 0, 1, 1], [], []>} : vector<16x128xf32>, vector<128x32xf32>, vector<16x32xf32> -> vector<16x32xf32>
    %147 = vector.extract_strided_slice %2 {offsets = [128, 0], sizes = [1, 32], strides = [1, 1]} : vector<129x32xf32> to vector<1x32xf32>
    %148 = vector.broadcast %147 : vector<1x32xf32> to vector<16x32xf32>
    %149 = arith.addf %146, %148 : vector<16x32xf32>
    %150 = arith.addf %126, %149 : vector<16x32xf32>
    %151 = vector.extract_strided_slice %0 {offsets = [4, 0], sizes = [1, 32], strides = [1, 1]} : vector<8x32xf32> to vector<1x32xf32>
    %152 = vector.extract_strided_slice %0 {offsets = [5, 0], sizes = [1, 32], strides = [1, 1]} : vector<8x32xf32> to vector<1x32xf32>
    %cst_38 = arith.constant dense<0.000000e+00> : vector<16xf32>
    %153 = vector.multi_reduction <add>, %150, %cst_38 [1] : vector<16x32xf32> to vector<16xf32>
    %154 = vector.shape_cast %153 : vector<16xf32> to vector<16x1xf32>
    %cst_39 = arith.constant 3.200000e+01 : f32
    %155 = vector.broadcast %cst_39 : f32 to vector<16x1xf32>
    %156 = arith.divf %154, %155 : vector<16x1xf32>
    %157 = vector.broadcast %156 : vector<16x1xf32> to vector<16x32xf32>
    %158 = arith.subf %150, %157 : vector<16x32xf32>
    %159 = arith.mulf %158, %158 : vector<16x32xf32>
    %cst_40 = arith.constant dense<0.000000e+00> : vector<16xf32>
    %160 = vector.multi_reduction <add>, %159, %cst_40 [1] : vector<16x32xf32> to vector<16xf32>
    %161 = vector.shape_cast %160 : vector<16xf32> to vector<16x1xf32>
    %cst_41 = arith.constant 3.200000e+01 : f32
    %162 = vector.broadcast %cst_41 : f32 to vector<16x1xf32>
    %163 = arith.divf %161, %162 : vector<16x1xf32>
    %164 = vector.broadcast %156 : vector<16x1xf32> to vector<16x32xf32>
    %165 = arith.subf %150, %164 : vector<16x32xf32>
    %cst_42 = arith.constant 9.99999996E-13 : f32
    %166 = vector.broadcast %cst_42 : f32 to vector<16x1xf32>
    %167 = arith.addf %163, %166 : vector<16x1xf32>
    %168 = math.rsqrt %167 : vector<16x1xf32>
    %169 = vector.broadcast %168 : vector<16x1xf32> to vector<16x32xf32>
    %170 = arith.mulf %165, %169 : vector<16x32xf32>
    %171 = vector.broadcast %151 : vector<1x32xf32> to vector<16x32xf32>
    %172 = arith.mulf %170, %171 : vector<16x32xf32>
    %173 = vector.broadcast %152 : vector<1x32xf32> to vector<16x32xf32>
    %174 = arith.addf %172, %173 : vector<16x32xf32>
    %175 = vector.extract_strided_slice %0 {offsets = [6, 0], sizes = [2, 32], strides = [1, 1]} : vector<8x32xf32> to vector<2x32xf32>
    %cst_43 = arith.constant dense<0.000000e+00> : vector<16x2xf32>
    %176 = tpu.matmul %174, %175, %cst_43 {dimension_numbers = #tpu.dot_dimension_numbers<[1], [1], [0], [0], [0, 0, 1, 0], [], []>} : vector<16x32xf32>, vector<2x32xf32>, vector<16x2xf32> -> vector<16x2xf32>
    %177 = tpu.iota {dimensions = array<i32: 1>} : vector<8x2xi32>
    %cst_44 = arith.constant 0.000000e+00 : f32
    %178 = vector.broadcast %cst_44 : f32 to vector<8x2xf32>
    %cst_45 = arith.constant 0.000000e+00 : f32
    %179 = vector.broadcast %cst_45 : f32 to vector<8x2xf32>
    %180 = vector.extract_strided_slice %176 {offsets = [0, 0], sizes = [8, 2], strides = [1, 1]} : vector<16x2xf32> to vector<8x2xf32>
    %c0_i32_46 = arith.constant 0 : i32
    %181 = vector.broadcast %c0_i32_46 : i32 to vector<8x2xi32>
    %182 = arith.cmpi eq, %177, %181 : vector<8x2xi32>
    %183 = vector.extract_strided_slice %180 {offsets = [0, 0], sizes = [8, 1], strides = [1, 1]} : vector<8x2xf32> to vector<8x1xf32>
    %184 = vector.shape_cast %183 : vector<8x1xf32> to vector<8x1xf32>
    %185 = vector.broadcast %184 : vector<8x1xf32> to vector<8x2xf32>
    %186 = arith.select %182, %185, %178 : vector<8x2xi1>, vector<8x2xf32>
    %c0_i32_47 = arith.constant 0 : i32
    %187 = vector.broadcast %c0_i32_47 : i32 to vector<8x2xi32>
    %188 = arith.cmpi eq, %177, %187 : vector<8x2xi32>
    %189 = vector.extract_strided_slice %180 {offsets = [0, 1], sizes = [8, 1], strides = [1, 1]} : vector<8x2xf32> to vector<8x1xf32>
    %190 = vector.shape_cast %189 : vector<8x1xf32> to vector<8x1xf32>
    %191 = vector.broadcast %190 : vector<8x1xf32> to vector<8x2xf32>
    %192 = arith.select %188, %191, %179 : vector<8x2xi1>, vector<8x2xf32>
    %193 = vector.extract_strided_slice %176 {offsets = [8, 0], sizes = [8, 2], strides = [1, 1]} : vector<16x2xf32> to vector<8x2xf32>
    %c1_i32_48 = arith.constant 1 : i32
    %194 = vector.broadcast %c1_i32_48 : i32 to vector<8x2xi32>
    %195 = arith.cmpi eq, %177, %194 : vector<8x2xi32>
    %196 = vector.extract_strided_slice %193 {offsets = [0, 0], sizes = [8, 1], strides = [1, 1]} : vector<8x2xf32> to vector<8x1xf32>
    %197 = vector.shape_cast %196 : vector<8x1xf32> to vector<8x1xf32>
    %198 = vector.broadcast %197 : vector<8x1xf32> to vector<8x2xf32>
    %199 = arith.select %195, %198, %186 : vector<8x2xi1>, vector<8x2xf32>
    %c1_i32_49 = arith.constant 1 : i32
    %200 = vector.broadcast %c1_i32_49 : i32 to vector<8x2xi32>
    %201 = arith.cmpi eq, %177, %200 : vector<8x2xi32>
    %202 = vector.extract_strided_slice %193 {offsets = [0, 1], sizes = [8, 1], strides = [1, 1]} : vector<8x2xf32> to vector<8x1xf32>
    %203 = vector.shape_cast %202 : vector<8x1xf32> to vector<8x1xf32>
    %204 = vector.broadcast %203 : vector<8x1xf32> to vector<8x2xf32>
    %205 = arith.select %201, %204, %192 : vector<8x2xi1>, vector<8x2xf32>
    %c8 = arith.constant 8 : index
    %206 = memref.load %arg7[%c8] : memref<10xf32, #tpu.memory_space<smem>>
    %207 = vector.broadcast %206 : f32 to vector<8x2xf32>
    %208 = arith.addf %199, %207 : vector<8x2xf32>
    %c9 = arith.constant 9 : index
    %209 = memref.load %arg7[%c9] : memref<10xf32, #tpu.memory_space<smem>>
    %210 = vector.broadcast %209 : f32 to vector<8x2xf32>
    %211 = arith.addf %205, %210 : vector<8x2xf32>
    %212 = tpu.iota {dimensions = array<i32: 0>} : vector<8x8xi32>
    %213 = tpu.iota {dimensions = array<i32: 1>} : vector<8x8xi32>
    %214 = arith.cmpi eq, %212, %213 : vector<8x8xi32>
    %215 = arith.extui %214 : vector<8x8xi1> to vector<8x8xi32>
    %216 = arith.sitofp %215 : vector<8x8xi32> to vector<8x8xf32>
    %cst_50 = arith.constant dense<0.000000e+00> : vector<8x2xf32>
    %217 = tpu.matmul %216, %62, %cst_50 {dimension_numbers = #tpu.dot_dimension_numbers<[1], [1], [0], [0], [0, 0, 1, 0], [], []>} : vector<8x8xf32>, vector<2x8xf32>, vector<8x2xf32> -> vector<8x2xf32>
    %c0_51 = arith.constant 0 : index
    %c0_52 = arith.constant 0 : index
    %218 = vector.load %arg2[%c0_51, %c0_52] : memref<2x2xi32, #tpu.memory_space<vmem>>, vector<1x2xi32>
    %c1_53 = arith.constant 1 : index
    %c0_54 = arith.constant 0 : index
    %219 = vector.load %arg2[%c1_53, %c0_54] : memref<2x2xi32, #tpu.memory_space<vmem>>, vector<1x2xi32>
    %220 = tpu.iota {dimensions = array<i32: 0>} : vector<8x2xi32>
    %c0_i32_55 = arith.constant 0 : i32
    %221 = vector.broadcast %c0_i32_55 : i32 to vector<1x2xi32>
    %222 = arith.cmpi sge, %218, %221 : vector<1x2xi32>
    %c8_i32 = arith.constant 8 : i32
    %223 = vector.broadcast %c8_i32 : i32 to vector<1x2xi32>
    %224 = arith.cmpi slt, %218, %223 : vector<1x2xi32>
    %225 = arith.andi %222, %224 : vector<1x2xi1>
    %c0_i32_56 = arith.constant 0 : i32
    %226 = vector.broadcast %c0_i32_56 : i32 to vector<1x2xi32>
    %227 = arith.cmpi sge, %219, %226 : vector<1x2xi32>
    %228 = arith.andi %225, %227 : vector<1x2xi1>
    %c8_i32_57 = arith.constant 8 : i32
    %229 = vector.broadcast %c8_i32_57 : i32 to vector<1x2xi32>
    %230 = arith.cmpi slt, %219, %229 : vector<1x2xi32>
    %231 = arith.andi %228, %230 : vector<1x2xi1>
    %232 = arith.cmpi sle, %218, %219 : vector<1x2xi32>
    %233 = arith.andi %231, %232 : vector<1x2xi1>
    %234 = vector.broadcast %218 : vector<1x2xi32> to vector<8x2xi32>
    %235 = arith.cmpi sge, %220, %234 : vector<8x2xi32>
    %236 = vector.broadcast %233 : vector<1x2xi1> to vector<8x2xi1>
    %237 = arith.andi %236, %235 : vector<8x2xi1>
    %238 = vector.broadcast %219 : vector<1x2xi32> to vector<8x2xi32>
    %239 = arith.cmpi sle, %220, %238 : vector<8x2xi32>
    %240 = arith.andi %237, %239 : vector<8x2xi1>
    %c1_i32_58 = arith.constant 1 : i32
    %c0_i32_59 = arith.constant 0 : i32
    %241 = vector.broadcast %c1_i32_58 : i32 to vector<8x2xi32>
    %242 = vector.broadcast %c0_i32_59 : i32 to vector<8x2xi32>
    %243 = arith.select %240, %241, %242 : vector<8x2xi1>, vector<8x2xi32>
    %c0_60 = arith.constant 0 : index
    %244 = memref.load %arg7[%c0_60] : memref<10xf32, #tpu.memory_space<smem>>
    %245 = vector.broadcast %244 : f32 to vector<1x2xf32>
    %c1_61 = arith.constant 1 : index
    %246 = memref.load %arg7[%c1_61] : memref<10xf32, #tpu.memory_space<smem>>
    %247 = vector.broadcast %246 : f32 to vector<1x2xf32>
    %c2 = arith.constant 2 : index
    %248 = memref.load %arg7[%c2] : memref<10xf32, #tpu.memory_space<smem>>
    %249 = vector.broadcast %248 : f32 to vector<1x2xf32>
    %c3 = arith.constant 3 : index
    %250 = memref.load %arg7[%c3] : memref<10xf32, #tpu.memory_space<smem>>
    %251 = vector.broadcast %250 : f32 to vector<1x2xf32>
    %c4 = arith.constant 4 : index
    %252 = memref.load %arg7[%c4] : memref<10xf32, #tpu.memory_space<smem>>
    %253 = vector.broadcast %252 : f32 to vector<1x2xf32>
    %c5 = arith.constant 5 : index
    %254 = memref.load %arg7[%c5] : memref<10xf32, #tpu.memory_space<smem>>
    %255 = vector.broadcast %254 : f32 to vector<1x2xf32>
    %c6 = arith.constant 6 : index
    %256 = memref.load %arg7[%c6] : memref<10xf32, #tpu.memory_space<smem>>
    %257 = vector.broadcast %256 : f32 to vector<1x2xf32>
    %c7 = arith.constant 7 : index
    %258 = memref.load %arg7[%c7] : memref<10xf32, #tpu.memory_space<smem>>
    %259 = vector.broadcast %258 : f32 to vector<1x2xf32>
    %260 = vector.extract_strided_slice %208 {offsets = [0, 0], sizes = [1, 2], strides = [1, 1]} : vector<8x2xf32> to vector<1x2xf32>
    %261 = vector.extract_strided_slice %211 {offsets = [0, 0], sizes = [1, 2], strides = [1, 1]} : vector<8x2xf32> to vector<1x2xf32>
    %262 = vector.extract_strided_slice %243 {offsets = [0, 0], sizes = [1, 2], strides = [1, 1]} : vector<8x2xi32> to vector<1x2xi32>
    %263 = arith.addf %260, %245 : vector<1x2xf32>
    %264 = arith.addf %261, %247 : vector<1x2xf32>
    %c1_i32_62 = arith.constant 1 : i32
    %265 = vector.broadcast %c1_i32_62 : i32 to vector<1x2xi32>
    %266 = arith.cmpi eq, %262, %265 : vector<1x2xi32>
    %267 = arith.select %266, %264, %263 : vector<1x2xi1>, vector<1x2xf32>
    %268 = vector.extract_strided_slice %208 {offsets = [1, 0], sizes = [1, 2], strides = [1, 1]} : vector<8x2xf32> to vector<1x2xf32>
    %269 = vector.extract_strided_slice %211 {offsets = [1, 0], sizes = [1, 2], strides = [1, 1]} : vector<8x2xf32> to vector<1x2xf32>
    %270 = vector.extract_strided_slice %217 {offsets = [1, 0], sizes = [1, 2], strides = [1, 1]} : vector<8x2xf32> to vector<1x2xf32>
    %271 = vector.extract_strided_slice %243 {offsets = [1, 0], sizes = [1, 2], strides = [1, 1]} : vector<8x2xi32> to vector<1x2xi32>
    %272 = arith.addf %263, %253 : vector<1x2xf32>
    %273 = arith.addf %264, %257 : vector<1x2xf32>
    %274 = arith.maximumf %272, %273 : vector<1x2xf32>
    %275 = arith.subf %272, %274 : vector<1x2xf32>
    %276 = math.exp %275 : vector<1x2xf32>
    %277 = arith.subf %273, %274 : vector<1x2xf32>
    %278 = math.exp %277 : vector<1x2xf32>
    %279 = arith.addf %276, %278 : vector<1x2xf32>
    %280 = math.log %279 : vector<1x2xf32>
    %281 = arith.addf %274, %280 : vector<1x2xf32>
    %282 = arith.addf %281, %268 : vector<1x2xf32>
    %283 = arith.addf %263, %255 : vector<1x2xf32>
    %284 = arith.addf %264, %259 : vector<1x2xf32>
    %285 = arith.maximumf %283, %284 : vector<1x2xf32>
    %286 = arith.subf %283, %285 : vector<1x2xf32>
    %287 = math.exp %286 : vector<1x2xf32>
    %288 = arith.subf %284, %285 : vector<1x2xf32>
    %289 = math.exp %288 : vector<1x2xf32>
    %290 = arith.addf %287, %289 : vector<1x2xf32>
    %291 = math.log %290 : vector<1x2xf32>
    %292 = arith.addf %285, %291 : vector<1x2xf32>
    %293 = arith.addf %292, %269 : vector<1x2xf32>
    %cst_63 = arith.constant 0.000000e+00 : f32
    %294 = vector.broadcast %cst_63 : f32 to vector<1x2xf32>
    %295 = arith.cmpf ogt, %270, %294 : vector<1x2xf32>
    %296 = arith.select %295, %282, %263 : vector<1x2xi1>, vector<1x2xf32>
    %297 = arith.select %295, %293, %264 : vector<1x2xi1>, vector<1x2xf32>
    %c1_i32_64 = arith.constant 1 : i32
    %298 = vector.broadcast %c1_i32_64 : i32 to vector<1x2xi32>
    %299 = arith.cmpi eq, %262, %298 : vector<1x2xi32>
    %c1_i32_65 = arith.constant 1 : i32
    %300 = vector.broadcast %c1_i32_65 : i32 to vector<1x2xi32>
    %301 = arith.cmpi eq, %271, %300 : vector<1x2xi32>
    %302 = arith.select %301, %259, %257 : vector<1x2xi1>, vector<1x2xf32>
    %c1_i32_66 = arith.constant 1 : i32
    %303 = vector.broadcast %c1_i32_66 : i32 to vector<1x2xi32>
    %304 = arith.cmpi eq, %271, %303 : vector<1x2xi32>
    %305 = arith.select %304, %255, %253 : vector<1x2xi1>, vector<1x2xf32>
    %306 = arith.select %299, %302, %305 : vector<1x2xi1>, vector<1x2xf32>
    %c1_i32_67 = arith.constant 1 : i32
    %307 = vector.broadcast %c1_i32_67 : i32 to vector<1x2xi32>
    %308 = arith.cmpi eq, %271, %307 : vector<1x2xi32>
    %309 = arith.select %308, %269, %268 : vector<1x2xi1>, vector<1x2xf32>
    %310 = arith.addf %306, %309 : vector<1x2xf32>
    %311 = arith.mulf %310, %270 : vector<1x2xf32>
    %312 = arith.addf %267, %311 : vector<1x2xf32>
    %313 = arith.select %295, %271, %262 : vector<1x2xi1>, vector<1x2xi32>
    %314 = vector.extract_strided_slice %208 {offsets = [2, 0], sizes = [1, 2], strides = [1, 1]} : vector<8x2xf32> to vector<1x2xf32>
    %315 = vector.extract_strided_slice %211 {offsets = [2, 0], sizes = [1, 2], strides = [1, 1]} : vector<8x2xf32> to vector<1x2xf32>
    %316 = vector.extract_strided_slice %217 {offsets = [2, 0], sizes = [1, 2], strides = [1, 1]} : vector<8x2xf32> to vector<1x2xf32>
    %317 = vector.extract_strided_slice %243 {offsets = [2, 0], sizes = [1, 2], strides = [1, 1]} : vector<8x2xi32> to vector<1x2xi32>
    %318 = arith.addf %296, %253 : vector<1x2xf32>
    %319 = arith.addf %297, %257 : vector<1x2xf32>
    %320 = arith.maximumf %318, %319 : vector<1x2xf32>
    %321 = arith.subf %318, %320 : vector<1x2xf32>
    %322 = math.exp %321 : vector<1x2xf32>
    %323 = arith.subf %319, %320 : vector<1x2xf32>
    %324 = math.exp %323 : vector<1x2xf32>
    %325 = arith.addf %322, %324 : vector<1x2xf32>
    %326 = math.log %325 : vector<1x2xf32>
    %327 = arith.addf %320, %326 : vector<1x2xf32>
    %328 = arith.addf %327, %314 : vector<1x2xf32>
    %329 = arith.addf %296, %255 : vector<1x2xf32>
    %330 = arith.addf %297, %259 : vector<1x2xf32>
    %331 = arith.maximumf %329, %330 : vector<1x2xf32>
    %332 = arith.subf %329, %331 : vector<1x2xf32>
    %333 = math.exp %332 : vector<1x2xf32>
    %334 = arith.subf %330, %331 : vector<1x2xf32>
    %335 = math.exp %334 : vector<1x2xf32>
    %336 = arith.addf %333, %335 : vector<1x2xf32>
    %337 = math.log %336 : vector<1x2xf32>
    %338 = arith.addf %331, %337 : vector<1x2xf32>
    %339 = arith.addf %338, %315 : vector<1x2xf32>
    %cst_68 = arith.constant 0.000000e+00 : f32
    %340 = vector.broadcast %cst_68 : f32 to vector<1x2xf32>
    %341 = arith.cmpf ogt, %316, %340 : vector<1x2xf32>
    %342 = arith.select %341, %328, %296 : vector<1x2xi1>, vector<1x2xf32>
    %343 = arith.select %341, %339, %297 : vector<1x2xi1>, vector<1x2xf32>
    %c1_i32_69 = arith.constant 1 : i32
    %344 = vector.broadcast %c1_i32_69 : i32 to vector<1x2xi32>
    %345 = arith.cmpi eq, %271, %344 : vector<1x2xi32>
    %c1_i32_70 = arith.constant 1 : i32
    %346 = vector.broadcast %c1_i32_70 : i32 to vector<1x2xi32>
    %347 = arith.cmpi eq, %317, %346 : vector<1x2xi32>
    %348 = arith.select %347, %259, %257 : vector<1x2xi1>, vector<1x2xf32>
    %c1_i32_71 = arith.constant 1 : i32
    %349 = vector.broadcast %c1_i32_71 : i32 to vector<1x2xi32>
    %350 = arith.cmpi eq, %317, %349 : vector<1x2xi32>
    %351 = arith.select %350, %255, %253 : vector<1x2xi1>, vector<1x2xf32>
    %352 = arith.select %345, %348, %351 : vector<1x2xi1>, vector<1x2xf32>
    %c1_i32_72 = arith.constant 1 : i32
    %353 = vector.broadcast %c1_i32_72 : i32 to vector<1x2xi32>
    %354 = arith.cmpi eq, %317, %353 : vector<1x2xi32>
    %355 = arith.select %354, %315, %314 : vector<1x2xi1>, vector<1x2xf32>
    %356 = arith.addf %352, %355 : vector<1x2xf32>
    %357 = arith.mulf %356, %316 : vector<1x2xf32>
    %358 = arith.addf %312, %357 : vector<1x2xf32>
    %359 = arith.select %341, %317, %313 : vector<1x2xi1>, vector<1x2xi32>
    %360 = vector.extract_strided_slice %208 {offsets = [3, 0], sizes = [1, 2], strides = [1, 1]} : vector<8x2xf32> to vector<1x2xf32>
    %361 = vector.extract_strided_slice %211 {offsets = [3, 0], sizes = [1, 2], strides = [1, 1]} : vector<8x2xf32> to vector<1x2xf32>
    %362 = vector.extract_strided_slice %217 {offsets = [3, 0], sizes = [1, 2], strides = [1, 1]} : vector<8x2xf32> to vector<1x2xf32>
    %363 = vector.extract_strided_slice %243 {offsets = [3, 0], sizes = [1, 2], strides = [1, 1]} : vector<8x2xi32> to vector<1x2xi32>
    %364 = arith.addf %342, %253 : vector<1x2xf32>
    %365 = arith.addf %343, %257 : vector<1x2xf32>
    %366 = arith.maximumf %364, %365 : vector<1x2xf32>
    %367 = arith.subf %364, %366 : vector<1x2xf32>
    %368 = math.exp %367 : vector<1x2xf32>
    %369 = arith.subf %365, %366 : vector<1x2xf32>
    %370 = math.exp %369 : vector<1x2xf32>
    %371 = arith.addf %368, %370 : vector<1x2xf32>
    %372 = math.log %371 : vector<1x2xf32>
    %373 = arith.addf %366, %372 : vector<1x2xf32>
    %374 = arith.addf %373, %360 : vector<1x2xf32>
    %375 = arith.addf %342, %255 : vector<1x2xf32>
    %376 = arith.addf %343, %259 : vector<1x2xf32>
    %377 = arith.maximumf %375, %376 : vector<1x2xf32>
    %378 = arith.subf %375, %377 : vector<1x2xf32>
    %379 = math.exp %378 : vector<1x2xf32>
    %380 = arith.subf %376, %377 : vector<1x2xf32>
    %381 = math.exp %380 : vector<1x2xf32>
    %382 = arith.addf %379, %381 : vector<1x2xf32>
    %383 = math.log %382 : vector<1x2xf32>
    %384 = arith.addf %377, %383 : vector<1x2xf32>
    %385 = arith.addf %384, %361 : vector<1x2xf32>
    %cst_73 = arith.constant 0.000000e+00 : f32
    %386 = vector.broadcast %cst_73 : f32 to vector<1x2xf32>
    %387 = arith.cmpf ogt, %362, %386 : vector<1x2xf32>
    %388 = arith.select %387, %374, %342 : vector<1x2xi1>, vector<1x2xf32>
    %389 = arith.select %387, %385, %343 : vector<1x2xi1>, vector<1x2xf32>
    %c1_i32_74 = arith.constant 1 : i32
    %390 = vector.broadcast %c1_i32_74 : i32 to vector<1x2xi32>
    %391 = arith.cmpi eq, %317, %390 : vector<1x2xi32>
    %c1_i32_75 = arith.constant 1 : i32
    %392 = vector.broadcast %c1_i32_75 : i32 to vector<1x2xi32>
    %393 = arith.cmpi eq, %363, %392 : vector<1x2xi32>
    %394 = arith.select %393, %259, %257 : vector<1x2xi1>, vector<1x2xf32>
    %c1_i32_76 = arith.constant 1 : i32
    %395 = vector.broadcast %c1_i32_76 : i32 to vector<1x2xi32>
    %396 = arith.cmpi eq, %363, %395 : vector<1x2xi32>
    %397 = arith.select %396, %255, %253 : vector<1x2xi1>, vector<1x2xf32>
    %398 = arith.select %391, %394, %397 : vector<1x2xi1>, vector<1x2xf32>
    %c1_i32_77 = arith.constant 1 : i32
    %399 = vector.broadcast %c1_i32_77 : i32 to vector<1x2xi32>
    %400 = arith.cmpi eq, %363, %399 : vector<1x2xi32>
    %401 = arith.select %400, %361, %360 : vector<1x2xi1>, vector<1x2xf32>
    %402 = arith.addf %398, %401 : vector<1x2xf32>
    %403 = arith.mulf %402, %362 : vector<1x2xf32>
    %404 = arith.addf %358, %403 : vector<1x2xf32>
    %405 = arith.select %387, %363, %359 : vector<1x2xi1>, vector<1x2xi32>
    %406 = vector.extract_strided_slice %208 {offsets = [4, 0], sizes = [1, 2], strides = [1, 1]} : vector<8x2xf32> to vector<1x2xf32>
    %407 = vector.extract_strided_slice %211 {offsets = [4, 0], sizes = [1, 2], strides = [1, 1]} : vector<8x2xf32> to vector<1x2xf32>
    %408 = vector.extract_strided_slice %217 {offsets = [4, 0], sizes = [1, 2], strides = [1, 1]} : vector<8x2xf32> to vector<1x2xf32>
    %409 = vector.extract_strided_slice %243 {offsets = [4, 0], sizes = [1, 2], strides = [1, 1]} : vector<8x2xi32> to vector<1x2xi32>
    %410 = arith.addf %388, %253 : vector<1x2xf32>
    %411 = arith.addf %389, %257 : vector<1x2xf32>
    %412 = arith.maximumf %410, %411 : vector<1x2xf32>
    %413 = arith.subf %410, %412 : vector<1x2xf32>
    %414 = math.exp %413 : vector<1x2xf32>
    %415 = arith.subf %411, %412 : vector<1x2xf32>
    %416 = math.exp %415 : vector<1x2xf32>
    %417 = arith.addf %414, %416 : vector<1x2xf32>
    %418 = math.log %417 : vector<1x2xf32>
    %419 = arith.addf %412, %418 : vector<1x2xf32>
    %420 = arith.addf %419, %406 : vector<1x2xf32>
    %421 = arith.addf %388, %255 : vector<1x2xf32>
    %422 = arith.addf %389, %259 : vector<1x2xf32>
    %423 = arith.maximumf %421, %422 : vector<1x2xf32>
    %424 = arith.subf %421, %423 : vector<1x2xf32>
    %425 = math.exp %424 : vector<1x2xf32>
    %426 = arith.subf %422, %423 : vector<1x2xf32>
    %427 = math.exp %426 : vector<1x2xf32>
    %428 = arith.addf %425, %427 : vector<1x2xf32>
    %429 = math.log %428 : vector<1x2xf32>
    %430 = arith.addf %423, %429 : vector<1x2xf32>
    %431 = arith.addf %430, %407 : vector<1x2xf32>
    %cst_78 = arith.constant 0.000000e+00 : f32
    %432 = vector.broadcast %cst_78 : f32 to vector<1x2xf32>
    %433 = arith.cmpf ogt, %408, %432 : vector<1x2xf32>
    %434 = arith.select %433, %420, %388 : vector<1x2xi1>, vector<1x2xf32>
    %435 = arith.select %433, %431, %389 : vector<1x2xi1>, vector<1x2xf32>
    %c1_i32_79 = arith.constant 1 : i32
    %436 = vector.broadcast %c1_i32_79 : i32 to vector<1x2xi32>
    %437 = arith.cmpi eq, %363, %436 : vector<1x2xi32>
    %c1_i32_80 = arith.constant 1 : i32
    %438 = vector.broadcast %c1_i32_80 : i32 to vector<1x2xi32>
    %439 = arith.cmpi eq, %409, %438 : vector<1x2xi32>
    %440 = arith.select %439, %259, %257 : vector<1x2xi1>, vector<1x2xf32>
    %c1_i32_81 = arith.constant 1 : i32
    %441 = vector.broadcast %c1_i32_81 : i32 to vector<1x2xi32>
    %442 = arith.cmpi eq, %409, %441 : vector<1x2xi32>
    %443 = arith.select %442, %255, %253 : vector<1x2xi1>, vector<1x2xf32>
    %444 = arith.select %437, %440, %443 : vector<1x2xi1>, vector<1x2xf32>
    %c1_i32_82 = arith.constant 1 : i32
    %445 = vector.broadcast %c1_i32_82 : i32 to vector<1x2xi32>
    %446 = arith.cmpi eq, %409, %445 : vector<1x2xi32>
    %447 = arith.select %446, %407, %406 : vector<1x2xi1>, vector<1x2xf32>
    %448 = arith.addf %444, %447 : vector<1x2xf32>
    %449 = arith.mulf %448, %408 : vector<1x2xf32>
    %450 = arith.addf %404, %449 : vector<1x2xf32>
    %451 = arith.select %433, %409, %405 : vector<1x2xi1>, vector<1x2xi32>
    %452 = vector.extract_strided_slice %208 {offsets = [5, 0], sizes = [1, 2], strides = [1, 1]} : vector<8x2xf32> to vector<1x2xf32>
    %453 = vector.extract_strided_slice %211 {offsets = [5, 0], sizes = [1, 2], strides = [1, 1]} : vector<8x2xf32> to vector<1x2xf32>
    %454 = vector.extract_strided_slice %217 {offsets = [5, 0], sizes = [1, 2], strides = [1, 1]} : vector<8x2xf32> to vector<1x2xf32>
    %455 = vector.extract_strided_slice %243 {offsets = [5, 0], sizes = [1, 2], strides = [1, 1]} : vector<8x2xi32> to vector<1x2xi32>
    %456 = arith.addf %434, %253 : vector<1x2xf32>
    %457 = arith.addf %435, %257 : vector<1x2xf32>
    %458 = arith.maximumf %456, %457 : vector<1x2xf32>
    %459 = arith.subf %456, %458 : vector<1x2xf32>
    %460 = math.exp %459 : vector<1x2xf32>
    %461 = arith.subf %457, %458 : vector<1x2xf32>
    %462 = math.exp %461 : vector<1x2xf32>
    %463 = arith.addf %460, %462 : vector<1x2xf32>
    %464 = math.log %463 : vector<1x2xf32>
    %465 = arith.addf %458, %464 : vector<1x2xf32>
    %466 = arith.addf %465, %452 : vector<1x2xf32>
    %467 = arith.addf %434, %255 : vector<1x2xf32>
    %468 = arith.addf %435, %259 : vector<1x2xf32>
    %469 = arith.maximumf %467, %468 : vector<1x2xf32>
    %470 = arith.subf %467, %469 : vector<1x2xf32>
    %471 = math.exp %470 : vector<1x2xf32>
    %472 = arith.subf %468, %469 : vector<1x2xf32>
    %473 = math.exp %472 : vector<1x2xf32>
    %474 = arith.addf %471, %473 : vector<1x2xf32>
    %475 = math.log %474 : vector<1x2xf32>
    %476 = arith.addf %469, %475 : vector<1x2xf32>
    %477 = arith.addf %476, %453 : vector<1x2xf32>
    %cst_83 = arith.constant 0.000000e+00 : f32
    %478 = vector.broadcast %cst_83 : f32 to vector<1x2xf32>
    %479 = arith.cmpf ogt, %454, %478 : vector<1x2xf32>
    %480 = arith.select %479, %466, %434 : vector<1x2xi1>, vector<1x2xf32>
    %481 = arith.select %479, %477, %435 : vector<1x2xi1>, vector<1x2xf32>
    %c1_i32_84 = arith.constant 1 : i32
    %482 = vector.broadcast %c1_i32_84 : i32 to vector<1x2xi32>
    %483 = arith.cmpi eq, %409, %482 : vector<1x2xi32>
    %c1_i32_85 = arith.constant 1 : i32
    %484 = vector.broadcast %c1_i32_85 : i32 to vector<1x2xi32>
    %485 = arith.cmpi eq, %455, %484 : vector<1x2xi32>
    %486 = arith.select %485, %259, %257 : vector<1x2xi1>, vector<1x2xf32>
    %c1_i32_86 = arith.constant 1 : i32
    %487 = vector.broadcast %c1_i32_86 : i32 to vector<1x2xi32>
    %488 = arith.cmpi eq, %455, %487 : vector<1x2xi32>
    %489 = arith.select %488, %255, %253 : vector<1x2xi1>, vector<1x2xf32>
    %490 = arith.select %483, %486, %489 : vector<1x2xi1>, vector<1x2xf32>
    %c1_i32_87 = arith.constant 1 : i32
    %491 = vector.broadcast %c1_i32_87 : i32 to vector<1x2xi32>
    %492 = arith.cmpi eq, %455, %491 : vector<1x2xi32>
    %493 = arith.select %492, %453, %452 : vector<1x2xi1>, vector<1x2xf32>
    %494 = arith.addf %490, %493 : vector<1x2xf32>
    %495 = arith.mulf %494, %454 : vector<1x2xf32>
    %496 = arith.addf %450, %495 : vector<1x2xf32>
    %497 = arith.select %479, %455, %451 : vector<1x2xi1>, vector<1x2xi32>
    %498 = vector.extract_strided_slice %208 {offsets = [6, 0], sizes = [1, 2], strides = [1, 1]} : vector<8x2xf32> to vector<1x2xf32>
    %499 = vector.extract_strided_slice %211 {offsets = [6, 0], sizes = [1, 2], strides = [1, 1]} : vector<8x2xf32> to vector<1x2xf32>
    %500 = vector.extract_strided_slice %217 {offsets = [6, 0], sizes = [1, 2], strides = [1, 1]} : vector<8x2xf32> to vector<1x2xf32>
    %501 = vector.extract_strided_slice %243 {offsets = [6, 0], sizes = [1, 2], strides = [1, 1]} : vector<8x2xi32> to vector<1x2xi32>
    %502 = arith.addf %480, %253 : vector<1x2xf32>
    %503 = arith.addf %481, %257 : vector<1x2xf32>
    %504 = arith.maximumf %502, %503 : vector<1x2xf32>
    %505 = arith.subf %502, %504 : vector<1x2xf32>
    %506 = math.exp %505 : vector<1x2xf32>
    %507 = arith.subf %503, %504 : vector<1x2xf32>
    %508 = math.exp %507 : vector<1x2xf32>
    %509 = arith.addf %506, %508 : vector<1x2xf32>
    %510 = math.log %509 : vector<1x2xf32>
    %511 = arith.addf %504, %510 : vector<1x2xf32>
    %512 = arith.addf %511, %498 : vector<1x2xf32>
    %513 = arith.addf %480, %255 : vector<1x2xf32>
    %514 = arith.addf %481, %259 : vector<1x2xf32>
    %515 = arith.maximumf %513, %514 : vector<1x2xf32>
    %516 = arith.subf %513, %515 : vector<1x2xf32>
    %517 = math.exp %516 : vector<1x2xf32>
    %518 = arith.subf %514, %515 : vector<1x2xf32>
    %519 = math.exp %518 : vector<1x2xf32>
    %520 = arith.addf %517, %519 : vector<1x2xf32>
    %521 = math.log %520 : vector<1x2xf32>
    %522 = arith.addf %515, %521 : vector<1x2xf32>
    %523 = arith.addf %522, %499 : vector<1x2xf32>
    %cst_88 = arith.constant 0.000000e+00 : f32
    %524 = vector.broadcast %cst_88 : f32 to vector<1x2xf32>
    %525 = arith.cmpf ogt, %500, %524 : vector<1x2xf32>
    %526 = arith.select %525, %512, %480 : vector<1x2xi1>, vector<1x2xf32>
    %527 = arith.select %525, %523, %481 : vector<1x2xi1>, vector<1x2xf32>
    %c1_i32_89 = arith.constant 1 : i32
    %528 = vector.broadcast %c1_i32_89 : i32 to vector<1x2xi32>
    %529 = arith.cmpi eq, %455, %528 : vector<1x2xi32>
    %c1_i32_90 = arith.constant 1 : i32
    %530 = vector.broadcast %c1_i32_90 : i32 to vector<1x2xi32>
    %531 = arith.cmpi eq, %501, %530 : vector<1x2xi32>
    %532 = arith.select %531, %259, %257 : vector<1x2xi1>, vector<1x2xf32>
    %c1_i32_91 = arith.constant 1 : i32
    %533 = vector.broadcast %c1_i32_91 : i32 to vector<1x2xi32>
    %534 = arith.cmpi eq, %501, %533 : vector<1x2xi32>
    %535 = arith.select %534, %255, %253 : vector<1x2xi1>, vector<1x2xf32>
    %536 = arith.select %529, %532, %535 : vector<1x2xi1>, vector<1x2xf32>
    %c1_i32_92 = arith.constant 1 : i32
    %537 = vector.broadcast %c1_i32_92 : i32 to vector<1x2xi32>
    %538 = arith.cmpi eq, %501, %537 : vector<1x2xi32>
    %539 = arith.select %538, %499, %498 : vector<1x2xi1>, vector<1x2xf32>
    %540 = arith.addf %536, %539 : vector<1x2xf32>
    %541 = arith.mulf %540, %500 : vector<1x2xf32>
    %542 = arith.addf %496, %541 : vector<1x2xf32>
    %543 = arith.select %525, %501, %497 : vector<1x2xi1>, vector<1x2xi32>
    %544 = vector.extract_strided_slice %208 {offsets = [7, 0], sizes = [1, 2], strides = [1, 1]} : vector<8x2xf32> to vector<1x2xf32>
    %545 = vector.extract_strided_slice %211 {offsets = [7, 0], sizes = [1, 2], strides = [1, 1]} : vector<8x2xf32> to vector<1x2xf32>
    %546 = vector.extract_strided_slice %217 {offsets = [7, 0], sizes = [1, 2], strides = [1, 1]} : vector<8x2xf32> to vector<1x2xf32>
    %547 = vector.extract_strided_slice %243 {offsets = [7, 0], sizes = [1, 2], strides = [1, 1]} : vector<8x2xi32> to vector<1x2xi32>
    %548 = arith.addf %526, %253 : vector<1x2xf32>
    %549 = arith.addf %527, %257 : vector<1x2xf32>
    %550 = arith.maximumf %548, %549 : vector<1x2xf32>
    %551 = arith.subf %548, %550 : vector<1x2xf32>
    %552 = math.exp %551 : vector<1x2xf32>
    %553 = arith.subf %549, %550 : vector<1x2xf32>
    %554 = math.exp %553 : vector<1x2xf32>
    %555 = arith.addf %552, %554 : vector<1x2xf32>
    %556 = math.log %555 : vector<1x2xf32>
    %557 = arith.addf %550, %556 : vector<1x2xf32>
    %558 = arith.addf %557, %544 : vector<1x2xf32>
    %559 = arith.addf %526, %255 : vector<1x2xf32>
    %560 = arith.addf %527, %259 : vector<1x2xf32>
    %561 = arith.maximumf %559, %560 : vector<1x2xf32>
    %562 = arith.subf %559, %561 : vector<1x2xf32>
    %563 = math.exp %562 : vector<1x2xf32>
    %564 = arith.subf %560, %561 : vector<1x2xf32>
    %565 = math.exp %564 : vector<1x2xf32>
    %566 = arith.addf %563, %565 : vector<1x2xf32>
    %567 = math.log %566 : vector<1x2xf32>
    %568 = arith.addf %561, %567 : vector<1x2xf32>
    %569 = arith.addf %568, %545 : vector<1x2xf32>
    %cst_93 = arith.constant 0.000000e+00 : f32
    %570 = vector.broadcast %cst_93 : f32 to vector<1x2xf32>
    %571 = arith.cmpf ogt, %546, %570 : vector<1x2xf32>
    %572 = arith.select %571, %558, %526 : vector<1x2xi1>, vector<1x2xf32>
    %573 = arith.select %571, %569, %527 : vector<1x2xi1>, vector<1x2xf32>
    %c1_i32_94 = arith.constant 1 : i32
    %574 = vector.broadcast %c1_i32_94 : i32 to vector<1x2xi32>
    %575 = arith.cmpi eq, %501, %574 : vector<1x2xi32>
    %c1_i32_95 = arith.constant 1 : i32
    %576 = vector.broadcast %c1_i32_95 : i32 to vector<1x2xi32>
    %577 = arith.cmpi eq, %547, %576 : vector<1x2xi32>
    %578 = arith.select %577, %259, %257 : vector<1x2xi1>, vector<1x2xf32>
    %c1_i32_96 = arith.constant 1 : i32
    %579 = vector.broadcast %c1_i32_96 : i32 to vector<1x2xi32>
    %580 = arith.cmpi eq, %547, %579 : vector<1x2xi32>
    %581 = arith.select %580, %255, %253 : vector<1x2xi1>, vector<1x2xf32>
    %582 = arith.select %575, %578, %581 : vector<1x2xi1>, vector<1x2xf32>
    %c1_i32_97 = arith.constant 1 : i32
    %583 = vector.broadcast %c1_i32_97 : i32 to vector<1x2xi32>
    %584 = arith.cmpi eq, %547, %583 : vector<1x2xi32>
    %585 = arith.select %584, %545, %544 : vector<1x2xi1>, vector<1x2xf32>
    %586 = arith.addf %582, %585 : vector<1x2xf32>
    %587 = arith.mulf %586, %546 : vector<1x2xf32>
    %588 = arith.addf %542, %587 : vector<1x2xf32>
    %589 = arith.select %571, %547, %543 : vector<1x2xi1>, vector<1x2xi32>
    %c1_i32_98 = arith.constant 1 : i32
    %590 = vector.broadcast %c1_i32_98 : i32 to vector<1x2xi32>
    %591 = arith.cmpi eq, %589, %590 : vector<1x2xi32>
    %592 = arith.select %591, %251, %249 : vector<1x2xi1>, vector<1x2xf32>
    %593 = arith.addf %588, %592 : vector<1x2xf32>
    %594 = arith.addf %572, %249 : vector<1x2xf32>
    %595 = arith.addf %573, %251 : vector<1x2xf32>
    %596 = arith.maximumf %594, %595 : vector<1x2xf32>
    %597 = arith.subf %594, %596 : vector<1x2xf32>
    %598 = math.exp %597 : vector<1x2xf32>
    %599 = arith.subf %595, %596 : vector<1x2xf32>
    %600 = math.exp %599 : vector<1x2xf32>
    %601 = arith.addf %598, %600 : vector<1x2xf32>
    %602 = math.log %601 : vector<1x2xf32>
    %603 = arith.addf %596, %602 : vector<1x2xf32>
    %604 = arith.subf %603, %593 : vector<1x2xf32>
    %605 = vector.shape_cast %604 : vector<1x2xf32> to vector<1x1x2xf32>
    %cst_99 = arith.constant dense<0.000000e+00> : vector<1xf32>
    %606 = vector.multi_reduction <add>, %605, %cst_99 [1, 2] : vector<1x1x2xf32> to vector<1xf32>
    %607 = vector.shape_cast %606 : vector<1xf32> to vector<1x1x1xf32>
    %608 = vector.extract %607[0, 0, 0] : f32 from vector<1x1x1xf32>
    %609 = vector.broadcast %608 : f32 to vector<1x1xf32>
    %c0_100 = arith.constant 0 : index
    %c0_101 = arith.constant 0 : index
    %610 = vector.load %arg8[%c0_100, %c0_101] : memref<1x1xf32, #tpu.memory_space<vmem>>, vector<1x1xf32>
    tpu.vector_store %arg8[%c0_100, %c0_101], %609 {strides = array<i32>} : memref<1x1xf32, #tpu.memory_space<vmem>>, vector<1x1xf32>,
    return
  }
}

</mosaic_0001>

<llo_original>
// kernel: spanbert_crf_forward.1
$region0: #{spanbert_crf_forward.1}
  #allocation0 [shape = 'u32[]', space=smem, size = 0x4, offset = 0x4, fixed_abs, tag = 'smem constant byte address 0x4 - core index']
  #allocation1 [shape = 'u32[144,128]{1,0:T(1,128)}', space=vmem, size = 0x12000, scoped, tag = 'internal scratch']
  %s0 = inlined_call_operand.vmem [shape: s32[16,2], index: 0, kind: input, shape index: {}]
  %s1 = inlined_call_operand.vmem [shape: s32[2,8], index: 1, kind: input, shape index: {}]
  %s2 = inlined_call_operand.vmem [shape: s32[2,2], index: 2, kind: input, shape index: {}]
  %s3 = inlined_call_operand.vmem [shape: f32[170,32], index: 3, kind: input, shape index: {}]
  %s4 = inlined_call_operand.vmem [shape: f32[33,256], index: 4, kind: input, shape index: {}]
  %s5 = inlined_call_operand.vmem [shape: f32[129,32], index: 5, kind: input, shape index: {}]
  %s6 = inlined_call_operand.vmem [shape: f32[8,32], index: 6, kind: input, shape index: {}]
  %s7 = inlined_call_operand.vmem [shape: f32[10], index: 7, kind: input, shape index: {}]
  %s8 = inlined_call_operand.hbm [shape: f32[1,1], index: 8, kind: output, shape index: {}]
  %s9 = sld [smem:[#allocation0]]
  $region46: #{spanbert_crf_forward.1} parent=0
    _
  %s11 = ssub.s32 1, %s9
  %s12 = scalar_select 0, %s11, %s9
  $region1: #{spanbert_crf_forward.1} parent=0
    #allocation2 [shape = 'u8[512]{0}', space=smem, size = 0x200, scoped, tag = 'input window, operand 7, single buffered']
    #allocation3 [shape = 's32[1]{0}', space=sflag, size = 0x4, scoped, tag = 'scoped memory for spanbert_crf_forward.1']
    #allocation4 [shape = 's32[1]{0}', space=sflag, size = 0x4, scoped, tag = 'scoped memory for spanbert_crf_forward.1']
    #allocation5 [shape = 'u8[512]{0}', space=vmem, size = 0x400, scoped, tag = 'output window, operand 0, single buffered']
    %13 = vsyncpa [#allocation4], 0
    %14 = vsyncpa [#allocation3], 0
    // Predicated region
    $region2: #{spanbert_crf_forward.1} parent=1 // pred_check
      _
    $region3: #{spanbert_crf_forward.1} parent=1 // pred_check_branch
      %16 = sbr.rel (0) target = $region5
    $region4: #{spanbert_crf_forward.1} parent=1 // pred_region
      _
    $region5: #{spanbert_crf_forward.1} parent=1 // pred_fallthru
      _
    // Predicated region
    $region6: #{spanbert_crf_forward.1} parent=1 // pred_check
      _
    $region7: #{spanbert_crf_forward.1} parent=1 // pred_check_branch
      %18 = sbr.rel (0) target = $region9
    $region8: #{spanbert_crf_forward.1} parent=1 // pred_region
      _
    $region9: #{spanbert_crf_forward.1} parent=1 // pred_fallthru
      _
    // Predicated region
    $region10: #{spanbert_crf_forward.1} parent=1 // pred_check
      _
    $region11: #{spanbert_crf_forward.1} parent=1 // pred_check_branch
      %20 = sbr.rel (0) target = $region13
    $region12: #{spanbert_crf_forward.1} parent=1 // pred_region
      _
    $region13: #{spanbert_crf_forward.1} parent=1 // pred_fallthru
      _
    // Predicated region
    $region14: #{spanbert_crf_forward.1} parent=1 // pred_check
      _
    $region15: #{spanbert_crf_forward.1} parent=1 // pred_check_branch
      %22 = sbr.rel (0) target = $region17
    $region16: #{spanbert_crf_forward.1} parent=1 // pred_region
      _
    $region17: #{spanbert_crf_forward.1} parent=1 // pred_fallthru
      _
    // Predicated region
    $region18: #{spanbert_crf_forward.1} parent=1 // pred_check
      _
    $region19: #{spanbert_crf_forward.1} parent=1 // pred_check_branch
      %24 = sbr.rel (0) target = $region21
    $region20: #{spanbert_crf_forward.1} parent=1 // pred_region
      _
    $region21: #{spanbert_crf_forward.1} parent=1 // pred_fallthru
      _
    // Predicated region
    $region22: #{spanbert_crf_forward.1} parent=1 // pred_check
      _
    $region23: #{spanbert_crf_forward.1} parent=1 // pred_check_branch
      %26 = sbr.rel (0) target = $region25
    $region24: #{spanbert_crf_forward.1} parent=1 // pred_region
      _
    $region25: #{spanbert_crf_forward.1} parent=1 // pred_fallthru
      _
    // Predicated region
    $region26: #{spanbert_crf_forward.1} parent=1 // pred_check
      _
    $region27: #{spanbert_crf_forward.1} parent=1 // pred_check_branch
      %28 = sbr.rel (0) target = $region29
    $region28: #{spanbert_crf_forward.1} parent=1 // pred_region
      _
    $region29: #{spanbert_crf_forward.1} parent=1 // pred_fallthru
      _
    // Predicated region
    $region30: #{spanbert_crf_forward.1} parent=1 // pred_check
      _
    $region31: #{spanbert_crf_forward.1} parent=1 // pred_check_branch
      %30 = sbr.rel (0) target = $region33
    $region32: #{spanbert_crf_forward.1} parent=1 // pred_region
      %s32 = ssub.s32 16, 16
      %33 = vsyncadd [#allocation4], %s32
      %s35 = sshll.u32 %s7, 4
      %s36 = int_to_ptr.vmem [resolvable:$true] %s35
      %38 = dma.vmem_to_smem %s36, 16, [#allocation2], [#allocation4]
    $region33: #{spanbert_crf_forward.1} parent=1 // pred_fallthru
      _
    // Predicated region
    $region34: #{spanbert_crf_forward.1} parent=1 // pred_check
      _
    $region35: #{spanbert_crf_forward.1} parent=1 // pred_check_branch
      %40 = sbr.rel (0) target = $region37
    $region36: #{spanbert_crf_forward.1} parent=1 // pred_region
      %41 = dma.done [#allocation4], 16
    $region37: #{spanbert_crf_forward.1} parent=1 // pred_fallthru
      _
    %42 = sfence
    %v43 = vld [vmem:[%s6] sm:$0xff]
    %v44 = vld [vmem:[%s4] sm:$0xff]
    %v45 = vld [vmem:[%s4 + $0x8] sm:$0xff]
    %v46 = vld [vmem:[%s4 + $0x10] sm:$0xff]
    %v47 = vld [vmem:[%s4 + $0x18] sm:$0xff]
    %v48 = vld [vmem:[%s4 + $0x20] sm:$0xff]
    %v49 = vld [vmem:[%s4 + $0x28] sm:$0xff]
    %v50 = vld [vmem:[%s4 + $0x30] sm:$0xff]
    %v51 = vld [vmem:[%s4 + $0x38] sm:$0xff]
    %v52 = vld [vmem:[%s4 + $0x40] sm:$0x1]
    %v53 = vld [vmem:[%s4 + $0x48] sm:$0x1]
    %v54 = vld [vmem:[%s5] sm:$0xff]
    %v55 = vld [vmem:[%s5 + $0x8] sm:$0xff]
    %v56 = vld [vmem:[%s5 + $0x10] sm:$0xff]
    %v57 = vld [vmem:[%s5 + $0x18] sm:$0xff]
    %v58 = vld [vmem:[%s5 + $0x20] sm:$0xff]
    %v59 = vld [vmem:[%s5 + $0x28] sm:$0xff]
    %v60 = vld [vmem:[%s5 + $0x30] sm:$0xff]
    %v61 = vld [vmem:[%s5 + $0x38] sm:$0xff]
    %v62 = vld [vmem:[%s5 + $0x40] sm:$0xff]
    %v63 = vld [vmem:[%s5 + $0x48] sm:$0xff]
    %v64 = vld [vmem:[%s5 + $0x50] sm:$0xff]
    %v65 = vld [vmem:[%s5 + $0x58] sm:$0xff]
    %v66 = vld [vmem:[%s5 + $0x60] sm:$0xff]
    %v67 = vld [vmem:[%s5 + $0x68] sm:$0xff]
    %v68 = vld [vmem:[%s5 + $0x70] sm:$0xff]
    %v69 = vld [vmem:[%s5 + $0x78] sm:$0xff]
    %v70 = vld [vmem:[%s5 + $0x80] sm:$0x1]
    %v71 = vld [vmem:[%s3] sm:$0xff]
    %v72 = vld [vmem:[%s3 + $0x8] sm:$0xff]
    %v73 = vld [vmem:[%s3 + $0x10] sm:$0xff]
    %v74 = vld [vmem:[%s3 + $0x18] sm:$0xff]
    %v75 = vld [vmem:[%s3 + $0x20] sm:$0xff]
    %v76 = vld [vmem:[%s3 + $0x28] sm:$0xff]
    %v77 = vld [vmem:[%s3 + $0x30] sm:$0xff]
    %v78 = vld [vmem:[%s3 + $0x38] sm:$0xff]
    %v79 = vld [vmem:[%s3 + $0x40] sm:$0xff]
    %v80 = vld [vmem:[%s3 + $0x48] sm:$0xff]
    %v81 = vld [vmem:[%s3 + $0x50] sm:$0xff]
    %v82 = vld [vmem:[%s3 + $0x58] sm:$0xff]
    %v83 = vld [vmem:[%s3 + $0x60] sm:$0xff]
    %v84 = vld [vmem:[%s3 + $0x68] sm:$0xff]
    %v85 = vld [vmem:[%s3 + $0xa8] sm:$0x3]
    %v86 = vld [vmem:[%s0] sm:$0xff]
    %v87 = vld [vmem:[%s0 + $0x8] sm:$0xff]
    %v88 = vcvt.s32.f32 %v86
    %v89 = vcvt.s32.f32 %v87
    %v90 = vlaneseq
    %v91 = vand.u32 %v90, 127
    %92 = vset.pattern.permute.xlu0 0
    %93 = vperm.xlu0 %92, %v86
    %v94 = vpop.permute.xlu0 %93
    %95 = vset.pattern.permute.xlu0 0
    %96 = vperm.xlu0 %95, %v87
    %v97 = vpop.permute.xlu0 %96
    %vm98 = vcmp.eq.s32.totalorder %v94, %v91
    %vm99 = vcmp.eq.s32.totalorder %v97, %v91
    %v100 = vsel %vm98, 1, 0
    %v101 = vsel %vm99, 1, 0
    %v102 = vcvt.s32.f32 %v100
    %v103 = vcvt.s32.f32 %v101
    %v105 = vrot.slane %v85, 7
    %v107 = vsub.f32 %v85, %v105
    %109 = vset.pattern.permute.xlu0 1
    %110 = vperm.xlu0 %109, %v88
    %v111 = vpop.permute.xlu0 %110
    %114 = vset.pattern.permute.xlu0 1
    %115 = vperm.xlu0 %114, %v89
    %v116 = vpop.permute.xlu0 %115
    %v118 = vlaneseq
    %v119 = vshrl.u32 %v118, 7
    %v120 = vsub.s32 1, %v119
    %v121 = vrot.slane %v107, %v120
    %v122 = vmul.f32 %v111, %v121
    %v123 = vmul.f32 %v116, %v121
    %v124 = vlaneseq
    %v125 = vshrl.u32 %v124, 7
    %v126 = vsub.s32 0, %v125
    %v127 = vrot.slane %v85, %v126
    %v128 = vadd.f32 %v127, %v122
    %v129 = vadd.f32 %v127, %v123
    %vm130 = vcmask 850944
    %v132 = vsel %vm130, %v102, 0
    %v135 = vsel %vm130, %v103, 0
    %137 = vmatprep.subr.mxu0 0.0
    %138 = vmatpush1.msra.mxu0 %v71
    %139 = vmatprep.subr.mxu0 0.0
    %140 = vmatpush1.msra.mxu0 %v72
    %141 = vmatprep.subr.mxu0 0.0
    %142 = vmatpush1.msra.mxu0 %v73
    %143 = vmatprep.subr.mxu0 0.0
    %144 = vmatpush1.msra.mxu0 %v74
    %145 = vmatprep.subr.mxu0 0.0
    %146 = vmatpush1.msra.mxu0 %v75
    %147 = vmatprep.subr.mxu0 0.0
    %148 = vmatpush1.msra.mxu0 %v76
    %149 = vmatprep.subr.mxu0 0.0
    %150 = vmatpush1.msra.mxu0 %v77
    %151 = vmatprep.subr.mxu0 0.0
    %152 = vmatpush1.msra.mxu0 %v78
    %153 = vmatprep.subr.mxu0 0.0
    %154 = vmatpush1.msra.mxu0 %v79
    %155 = vmatprep.subr.mxu0 0.0
    %156 = vmatpush1.msra.mxu0 %v80
    %157 = vmatprep.subr.mxu0 0.0
    %158 = vmatpush1.msra.mxu0 %v81
    %159 = vmatprep.subr.mxu0 0.0
    %160 = vmatpush1.msra.mxu0 %v82
    %161 = vmatprep.subr.mxu0 0.0
    %162 = vmatpush1.msra.mxu0 %v83
    %163 = vmatprep.subr.mxu0 0.0
    %164 = vmatpush1.msra.mxu0 0.0
    %165 = vmatprep.subr.mxu0 0.0
    %166 = vmatpush1.msra.mxu0 0.0
    %167 = vmatprep.subr.mxu0 0.0
    %168 = vmatpush1.msra.mxu0 0.0
    %169 = vmatprep.subr.mxu0 0.0
    %170 = vmatpush1.msra.mxu0 0.0
    %171 = vmatprep.subr.mxu0 0.0
    %172 = vmatpush1.msra.mxu0 0.0
    %173 = vmatprep.subr.mxu0 0.0
    %174 = vmatpush1.msra.mxu0 0.0
    %175 = vmatprep.subr.mxu0 0.0
    %176 = vmatpush1.msra.mxu0 0.0
    %177 = vmatprep.subr.mxu0 0.0
    %178 = vmatpush1.msra.mxu0 0.0
    %179 = vmatprep.subr.mxu0 0.0
    %180 = vmatpush1.msra.mxu0 0.0
    %181 = vmatprep.subr.mxu0 0.0
    %182 = vmatpush1.msra.mxu0 0.0
    %183 = vmatprep.subr.mxu0 0.0
    %184 = vmatpush1.msra.mxu0 0.0
    %185 = vmatprep.subr.mxu0 0.0
    %186 = vmatpush1.msra.mxu0 0.0
    %187 = vmatprep.subr.mxu0 0.0
    %188 = vmatpush1.msra.mxu0 0.0
    %189 = vmatprep.subr.mxu0 0.0
    %190 = vmatpush1.msra.mxu0 0.0
    %191 = vmatprep.subr.mxu0 0.0
    %192 = vmatpush1.msra.mxu0 0.0
    %193 = vmatprep.subr.mxu0 0.0
    %194 = vmatpush1.msra.mxu0 0.0
    %195 = vmatprep.subr.mxu0 0.0
    %196 = vmatpush1.msra.mxu0 0.0
    %197 = vmatprep.subr.mxu0 0.0
    %198 = vmatpush1.msra.mxu0 0.0
    %199 = vmatprep.subr.mxu0 0.0
    %200 = vmatpush1.msra.mxu0 0.0
    %201 = vmatprep.mubr.f32.mxu0 0.0
    %202 = vmatmul.mubr.f32.gmra.mrb[0].mxu0 %v132
    %v203 = vpop.f32.mrb[0].mxu0
    %v204 = vadd.f32 %v84, %v203
    %v205 = vpop.f32.mrb[0].mxu0
    %206 = vmatprep.mubr.f32.mxu0 0.0
    %207 = vmatmul.mubr.f32.gmra.mrb[0].mxu0 %v135
    %v208 = vpop.f32.mrb[0].mxu0
    %v209 = vadd.f32 %v84, %v208
    %v210 = vpop.f32.mrb[0].mxu0
    %211 = vdwg.mxu0
    %v212 = vadd.f32 %v204, %v128
    %v213 = vadd.f32 %v209, %v129
    %vm214 = vcmask 261120
    %v215 = vsel %vm214, %v212, 0.0
    %216 = vadd.xlane.f32.xlu0 %v215
    %v217 = vpop.xlane.xlu0 %216
    %v218 = vsel %vm214, %v213, 0.0
    %219 = vadd.xlane.f32.xlu0 %v218
    %v220 = vpop.xlane.xlu0 %219
    %v221 = vrcp.pop 32.0
    %v222 = vmul.f32 %v217, %v221
    %v223 = vmul.f32 %v220, %v221
    %v224 = vsub.f32 %v212, %v222
    %v225 = vsub.f32 %v213, %v223
    %v226 = vmul.f32 %v224, %v224
    %v227 = vmul.f32 %v225, %v225
    %v228 = vsel %vm214, %v226, 0.0
    %229 = vadd.xlane.f32.xlu0 %v228
    %v230 = vpop.xlane.xlu0 %229
    %v231 = vsel %vm214, %v227, 0.0
    %232 = vadd.xlane.f32.xlu0 %v231
    %v233 = vpop.xlane.xlu0 %232
    %v234 = vmul.f32 %v230, %v221
    %v235 = vmul.f32 %v233, %v221
    %v236 = vadd.f32 %v234, 1e-12
    %v237 = vadd.f32 %v235, 1e-12
    %v238 = vrsqrt.pop %v236
    %v239 = vrsqrt.pop %v237
    %v240 = vmul.f32 %v224, %v238
    %v241 = vmul.f32 %v225, %v239
    %v242 = vlaneseq
    %v243 = vshrl.u32 %v242, 7
    %v244 = vsub.s32 0, %v243
    %v245 = vrot.slane %v43, %v244
    %v246 = vmul.f32 %v240, %v245
    %v247 = vmul.f32 %v241, %v245
    %v248 = vlaneseq
    %v249 = vshrl.u32 %v248, 7
    %v250 = vsub.s32 1, %v249
    %v251 = vrot.slane %v43, %v250
    %v252 = vadd.f32 %v246, %v251
    %v253 = vadd.f32 %v247, %v251
    %v254 = vlaneseq
    %v255 = vshrl.u32 %v254, 7
    %v256 = vsub.s32 0, %v255
    %v257 = vrot.slane %v52, %v256
    %v259 = vsel %vm214, %v252, 0
    %v262 = vsel %vm214, %v253, 0
    %264 = vmatprep.subr.mxu0 0.0
    %265 = vmatpush1.msra.mxu0 %v44
    %266 = vmatprep.subr.mxu0 0.0
    %267 = vmatpush1.msra.mxu0 %v46
    %268 = vmatprep.subr.mxu0 0.0
    %269 = vmatpush1.msra.mxu0 %v48
    %270 = vmatprep.subr.mxu0 0.0
    %271 = vmatpush1.msra.mxu0 %v50
    %272 = vmatprep.subr.mxu0 0.0
    %273 = vmatpush1.msra.mxu0 0.0
    %274 = vmatprep.subr.mxu0 0.0
    %275 = vmatpush1.msra.mxu0 0.0
    %276 = vmatprep.subr.mxu0 0.0
    %277 = vmatpush1.msra.mxu0 0.0
    %278 = vmatprep.subr.mxu0 0.0
    %279 = vmatpush1.msra.mxu0 0.0
    %280 = vmatprep.subr.mxu0 0.0
    %281 = vmatpush1.msra.mxu0 0.0
    %282 = vmatprep.subr.mxu0 0.0
    %283 = vmatpush1.msra.mxu0 0.0
    %284 = vmatprep.subr.mxu0 0.0
    %285 = vmatpush1.msra.mxu0 0.0
    %286 = vmatprep.subr.mxu0 0.0
    %287 = vmatpush1.msra.mxu0 0.0
    %288 = vmatprep.subr.mxu0 0.0
    %289 = vmatpush1.msra.mxu0 0.0
    %290 = vmatprep.subr.mxu0 0.0
    %291 = vmatpush1.msra.mxu0 0.0
    %292 = vmatprep.subr.mxu0 0.0
    %293 = vmatpush1.msra.mxu0 0.0
    %294 = vmatprep.subr.mxu0 0.0
    %295 = vmatpush1.msra.mxu0 0.0
    %296 = vmatprep.subr.mxu0 0.0
    %297 = vmatpush1.msra.mxu0 0.0
    %298 = vmatprep.subr.mxu0 0.0
    %299 = vmatpush1.msra.mxu0 0.0
    %300 = vmatprep.subr.mxu0 0.0
    %301 = vmatpush1.msra.mxu0 0.0
    %302 = vmatprep.subr.mxu0 0.0
    %303 = vmatpush1.msra.mxu0 0.0
    %304 = vmatprep.subr.mxu0 0.0
    %305 = vmatpush1.msra.mxu0 0.0
    %306 = vmatprep.subr.mxu0 0.0
    %307 = vmatpush1.msra.mxu0 0.0
    %308 = vmatprep.subr.mxu0 0.0
    %309 = vmatpush1.msra.mxu0 0.0
    %310 = vmatprep.subr.mxu0 0.0
    %311 = vmatpush1.msra.mxu0 0.0
    %312 = vmatprep.subr.mxu0 0.0
    %313 = vmatpush1.msra.mxu0 0.0
    %314 = vmatprep.subr.mxu0 0.0
    %315 = vmatpush1.msra.mxu0 0.0
    %316 = vmatprep.subr.mxu0 0.0
    %317 = vmatpush1.msra.mxu0 0.0
    %318 = vmatprep.subr.mxu0 0.0
    %319 = vmatpush1.msra.mxu0 0.0
    %320 = vmatprep.subr.mxu0 0.0
    %321 = vmatpush1.msra.mxu0 0.0
    %322 = vmatprep.subr.mxu0 0.0
    %323 = vmatpush1.msra.mxu0 0.0
    %324 = vmatprep.subr.mxu0 0.0
    %325 = vmatpush1.msra.mxu0 0.0
    %326 = vmatprep.subr.mxu0 0.0
    %327 = vmatpush1.msra.mxu0 0.0
    %328 = vmatprep.mubr.f32.mxu0 0.0
    %329 = vmatmul.mubr.f32.gmra.mrb[0].mxu0 %v259
    %v330 = vpop.f32.mrb[0].mxu0
    %v331 = vadd.f32 %v257, %v330
    %v332 = vpop.f32.mrb[0].mxu0
    %333 = vmatprep.mubr.f32.mxu0 0.0
    %334 = vmatmul.mubr.f32.gmra.mrb[0].mxu0 %v262
    %v335 = vpop.f32.mrb[0].mxu0
    %v336 = vadd.f32 %v257, %v335
    %v337 = vpop.f32.mrb[0].mxu0
    %338 = vdwg.mxu0
    %v339 = vld [vmem:[%s1] sm:$0x3]
    %v340 = vcvt.s32.f32 %v339
    %v341 = vsub.f32 1.0, %v340
    %v342 = vmul.f32 %v341, -1e+09
    %v343 = vlaneseq
    %v344 = vshrl.u32 %v343, 7
    %v345 = vsub.s32 0, %v344
    %v346 = vrot.slane %v342, %v345
    %v347 = vsel 1, %v346, 0.0
    %v348 = vsel 0, %v346, 0.0
    %v349 = vlaneseq
    %v350 = vshrl.u32 %v349, 7
    %v351 = vsub.s32 1, %v350
    %v352 = vrot.slane %v342, %v351
    %v353 = vsel 0, %v352, %v347
    %v354 = vsel 1, %v352, %v348
    %356 = vrot.lane.b32.xlu0 %v331, 96
    %v357 = vpop.permute.xlu0 %356
    %v358 = vsel %vm214, %v331, 0
    %v360 = vsel %vm214, %v357, 0
    %362 = vmatprep.subr.mxu0 0.0
    %363 = vmatpush1.xpose.msra.mxu0 %v360
    %364 = vmatprep.subr.mxu0 0.0
    %365 = vmatpush1.xpose.msra.mxu0 0.0
    %366 = vmatprep.subr.mxu0 0.0
    %367 = vmatpush1.xpose.msra.mxu0 0.0
    %368 = vmatprep.subr.mxu0 0.0
    %369 = vmatpush1.xpose.msra.mxu0 0.0
    %370 = vmatprep.subr.mxu0 0.0
    %371 = vmatpush1.xpose.msra.mxu0 0.0
    %372 = vmatprep.subr.mxu0 0.0
    %373 = vmatpush1.xpose.msra.mxu0 0.0
    %374 = vmatprep.subr.mxu0 0.0
    %375 = vmatpush1.xpose.msra.mxu0 0.0
    %376 = vmatprep.subr.mxu0 0.0
    %377 = vmatpush1.xpose.msra.mxu0 0.0
    %378 = vmatprep.subr.mxu0 0.0
    %379 = vmatpush1.xpose.msra.mxu0 0.0
    %380 = vmatprep.subr.mxu0 0.0
    %381 = vmatpush1.xpose.msra.mxu0 0.0
    %382 = vmatprep.subr.mxu0 0.0
    %383 = vmatpush1.xpose.msra.mxu0 0.0
    %384 = vmatprep.subr.mxu0 0.0
    %385 = vmatpush1.xpose.msra.mxu0 0.0
    %386 = vmatprep.subr.mxu0 0.0
    %387 = vmatpush1.xpose.msra.mxu0 0.0
    %388 = vmatprep.subr.mxu0 0.0
    %389 = vmatpush1.xpose.msra.mxu0 0.0
    %390 = vmatprep.subr.mxu0 0.0
    %391 = vmatpush1.xpose.msra.mxu0 0.0
    %392 = vmatprep.subr.mxu0 0.0
    %393 = vmatpush1.xpose.msra.mxu0 0.0
    %394 = vmatprep.subr.mxu0 0.0
    %395 = vmatpush1.xpose.msra.mxu0 0.0
    %396 = vmatprep.subr.mxu0 0.0
    %397 = vmatpush1.xpose.msra.mxu0 0.0
    %398 = vmatprep.subr.mxu0 0.0
    %399 = vmatpush1.xpose.msra.mxu0 0.0
    %400 = vmatprep.subr.mxu0 0.0
    %401 = vmatpush1.xpose.msra.mxu0 0.0
    %402 = vmatprep.subr.mxu0 0.0
    %403 = vmatpush1.xpose.msra.mxu0 0.0
    %404 = vmatprep.subr.mxu0 0.0
    %405 = vmatpush1.xpose.msra.mxu0 0.0
    %406 = vmatprep.subr.mxu0 0.0
    %407 = vmatpush1.xpose.msra.mxu0 0.0
    %408 = vmatprep.subr.mxu0 0.0
    %409 = vmatpush1.xpose.msra.mxu0 0.0
    %410 = vmatprep.subr.mxu0 0.0
    %411 = vmatpush1.xpose.msra.mxu0 0.0
    %412 = vmatprep.subr.mxu0 0.0
    %413 = vmatpush1.xpose.msra.mxu0 0.0
    %414 = vmatprep.subr.mxu0 0.0
    %415 = vmatpush1.xpose.msra.mxu0 0.0
    %416 = vmatprep.subr.mxu0 0.0
    %417 = vmatpush1.xpose.msra.mxu0 0.0
    %418 = vmatprep.subr.mxu0 0.0
    %419 = vmatpush1.xpose.msra.mxu0 0.0
    %420 = vmatprep.subr.mxu0 0.0
    %421 = vmatpush1.xpose.msra.mxu0 0.0
    %422 = vmatprep.subr.mxu0 0.0
    %423 = vmatpush1.xpose.msra.mxu0 0.0
    %424 = vmatprep.subr.mxu0 0.0
    %425 = vmatpush1.xpose.msra.mxu0 0.0
    %426 = vmatprep.mubr.f32.mxu0 0.0
    %427 = vmatmul.mubr.f32.gmra.mrb[0].mxu0 %v358
    %v428 = vpop.f32.mrb[0].mxu0
    %v429 = vadd.f32 0.0, %v428
    %v430 = vpop.f32.mrb[0].mxu0
    %431 = vdwg.mxu0
    %433 = vrot.lane.b32.xlu0 %v336, 96
    %v434 = vpop.permute.xlu0 %433
    %v435 = vsel %vm214, %v336, 0
    %v437 = vsel %vm214, %v434, 0
    %439 = vmatprep.subr.mxu0 0.0
    %440 = vmatpush1.xpose.msra.mxu0 %v437
    %441 = vmatprep.subr.mxu0 0.0
    %442 = vmatpush1.xpose.msra.mxu0 0.0
    %443 = vmatprep.subr.mxu0 0.0
    %444 = vmatpush1.xpose.msra.mxu0 0.0
    %445 = vmatprep.subr.mxu0 0.0
    %446 = vmatpush1.xpose.msra.mxu0 0.0
    %447 = vmatprep.subr.mxu0 0.0
    %448 = vmatpush1.xpose.msra.mxu0 0.0
    %449 = vmatprep.subr.mxu0 0.0
    %450 = vmatpush1.xpose.msra.mxu0 0.0
    %451 = vmatprep.subr.mxu0 0.0
    %452 = vmatpush1.xpose.msra.mxu0 0.0
    %453 = vmatprep.subr.mxu0 0.0
    %454 = vmatpush1.xpose.msra.mxu0 0.0
    %455 = vmatprep.subr.mxu0 0.0
    %456 = vmatpush1.xpose.msra.mxu0 0.0
    %457 = vmatprep.subr.mxu0 0.0
    %458 = vmatpush1.xpose.msra.mxu0 0.0
    %459 = vmatprep.subr.mxu0 0.0
    %460 = vmatpush1.xpose.msra.mxu0 0.0
    %461 = vmatprep.subr.mxu0 0.0
    %462 = vmatpush1.xpose.msra.mxu0 0.0
    %463 = vmatprep.subr.mxu0 0.0
    %464 = vmatpush1.xpose.msra.mxu0 0.0
    %465 = vmatprep.subr.mxu0 0.0
    %466 = vmatpush1.xpose.msra.mxu0 0.0
    %467 = vmatprep.subr.mxu0 0.0
    %468 = vmatpush1.xpose.msra.mxu0 0.0
    %469 = vmatprep.subr.mxu0 0.0
    %470 = vmatpush1.xpose.msra.mxu0 0.0
    %471 = vmatprep.subr.mxu0 0.0
    %472 = vmatpush1.xpose.msra.mxu0 0.0
    %473 = vmatprep.subr.mxu0 0.0
    %474 = vmatpush1.xpose.msra.mxu0 0.0
    %475 = vmatprep.subr.mxu0 0.0
    %476 = vmatpush1.xpose.msra.mxu0 0.0
    %477 = vmatprep.subr.mxu0 0.0
    %478 = vmatpush1.xpose.msra.mxu0 0.0
    %479 = vmatprep.subr.mxu0 0.0
    %480 = vmatpush1.xpose.msra.mxu0 0.0
    %481 = vmatprep.subr.mxu0 0.0
    %482 = vmatpush1.xpose.msra.mxu0 0.0
    %483 = vmatprep.subr.mxu0 0.0
    %484 = vmatpush1.xpose.msra.mxu0 0.0
    %485 = vmatprep.subr.mxu0 0.0
    %486 = vmatpush1.xpose.msra.mxu0 0.0
    %487 = vmatprep.subr.mxu0 0.0
    %488 = vmatpush1.xpose.msra.mxu0 0.0
    %489 = vmatprep.subr.mxu0 0.0
    %490 = vmatpush1.xpose.msra.mxu0 0.0
    %491 = vmatprep.subr.mxu0 0.0
    %492 = vmatpush1.xpose.msra.mxu0 0.0
    %493 = vmatprep.subr.mxu0 0.0
    %494 = vmatpush1.xpose.msra.mxu0 0.0
    %495 = vmatprep.subr.mxu0 0.0
    %496 = vmatpush1.xpose.msra.mxu0 0.0
    %497 = vmatprep.subr.mxu0 0.0
    %498 = vmatpush1.xpose.msra.mxu0 0.0
    %499 = vmatprep.subr.mxu0 0.0
    %500 = vmatpush1.xpose.msra.mxu0 0.0
    %501 = vmatprep.subr.mxu0 0.0
    %502 = vmatpush1.xpose.msra.mxu0 0.0
    %503 = vmatprep.mubr.f32.mxu0 0.0
    %504 = vmatmul.mubr.f32.gmra.mrb[0].mxu0 %v435
    %v505 = vpop.f32.mrb[0].mxu0
    %v506 = vadd.f32 0.0, %v505
    %v507 = vpop.f32.mrb[0].mxu0
    %508 = vdwg.mxu0
    %v509 = vmul.f32 %v429, 0.17677669
    %v510 = vmul.f32 %v506, 0.17677669
    %v511 = vadd.f32 %v509, %v353
    %v512 = vadd.f32 %v510, %v354
    %vm513 = vcmask 64512
    %v514 = vsel %vm513, %v511, -inf
    %515 = vmax.xlane.f32.xlu0 %v514
    %v516 = vpop.xlane.xlu0 %515
    %v517 = vsel %vm513, %v512, -inf
    %518 = vmax.xlane.f32.xlu0 %v517
    %v519 = vpop.xlane.xlu0 %518
    %v520 = vsub.f32 %v511, %v516
    %v521 = vsub.f32 %v512, %v519
    %v522 = vmul.f32 %v520, 1.442695
    %v523 = vpow.pop %v522
    %v524 = vmul.f32 %v521, 1.442695
    %v525 = vpow.pop %v524
    %v526 = vsel %vm513, %v523, 0.0
    %527 = vadd.xlane.f32.xlu0 %v526
    %v528 = vpop.xlane.xlu0 %527
    %v529 = vsel %vm513, %v525, 0.0
    %530 = vadd.xlane.f32.xlu0 %v529
    %v531 = vpop.xlane.xlu0 %530
    %v532 = vrcp.pop %v528
    %v533 = vrcp.pop %v531
    %v534 = vmul.f32 %v523, %v532
    %v535 = vmul.f32 %v525, %v533
    %536 = vrot.lane.b32.xlu0 %v331, 64
    %v537 = vpop.permute.xlu0 %536
    %v540 = vsel %vm513, %v534, 0
    %542 = vmatprep.subr.mxu0 0.0
    %543 = vmatpush1.msra.mxu0 %v537
    %544 = vmatprep.subr.mxu0 0.0
    %545 = vmatpush1.msra.mxu0 0.0
    %546 = vmatprep.subr.mxu0 0.0
    %547 = vmatpush1.msra.mxu0 0.0
    %548 = vmatprep.subr.mxu0 0.0
    %549 = vmatpush1.msra.mxu0 0.0
    %550 = vmatprep.subr.mxu0 0.0
    %551 = vmatpush1.msra.mxu0 0.0
    %552 = vmatprep.subr.mxu0 0.0
    %553 = vmatpush1.msra.mxu0 0.0
    %554 = vmatprep.subr.mxu0 0.0
    %555 = vmatpush1.msra.mxu0 0.0
    %556 = vmatprep.subr.mxu0 0.0
    %557 = vmatpush1.msra.mxu0 0.0
    %558 = vmatprep.subr.mxu0 0.0
    %559 = vmatpush1.msra.mxu0 0.0
    %560 = vmatprep.subr.mxu0 0.0
    %561 = vmatpush1.msra.mxu0 0.0
    %562 = vmatprep.subr.mxu0 0.0
    %563 = vmatpush1.msra.mxu0 0.0
    %564 = vmatprep.subr.mxu0 0.0
    %565 = vmatpush1.msra.mxu0 0.0
    %566 = vmatprep.subr.mxu0 0.0
    %567 = vmatpush1.msra.mxu0 0.0
    %568 = vmatprep.subr.mxu0 0.0
    %569 = vmatpush1.msra.mxu0 0.0
    %570 = vmatprep.subr.mxu0 0.0
    %571 = vmatpush1.msra.mxu0 0.0
    %572 = vmatprep.subr.mxu0 0.0
    %573 = vmatpush1.msra.mxu0 0.0
    %574 = vmatprep.subr.mxu0 0.0
    %575 = vmatpush1.msra.mxu0 0.0
    %576 = vmatprep.subr.mxu0 0.0
    %577 = vmatpush1.msra.mxu0 0.0
    %578 = vmatprep.subr.mxu0 0.0
    %579 = vmatpush1.msra.mxu0 0.0
    %580 = vmatprep.subr.mxu0 0.0
    %581 = vmatpush1.msra.mxu0 0.0
    %582 = vmatprep.subr.mxu0 0.0
    %583 = vmatpush1.msra.mxu0 0.0
    %584 = vmatprep.subr.mxu0 0.0
    %585 = vmatpush1.msra.mxu0 0.0
    %586 = vmatprep.subr.mxu0 0.0
    %587 = vmatpush1.msra.mxu0 0.0
    %588 = vmatprep.subr.mxu0 0.0
    %589 = vmatpush1.msra.mxu0 0.0
    %590 = vmatprep.subr.mxu0 0.0
    %591 = vmatpush1.msra.mxu0 0.0
    %592 = vmatprep.subr.mxu0 0.0
    %593 = vmatpush1.msra.mxu0 0.0
    %594 = vmatprep.subr.mxu0 0.0
    %595 = vmatpush1.msra.mxu0 0.0
    %596 = vmatprep.subr.mxu0 0.0
    %597 = vmatpush1.msra.mxu0 0.0
    %598 = vmatprep.subr.mxu0 0.0
    %599 = vmatpush1.msra.mxu0 0.0
    %600 = vmatprep.subr.mxu0 0.0
    %601 = vmatpush1.msra.mxu0 0.0
    %602 = vmatprep.subr.mxu0 0.0
    %603 = vmatpush1.msra.mxu0 0.0
    %604 = vmatprep.subr.mxu0 0.0
    %605 = vmatpush1.msra.mxu0 0.0
    %606 = vmatprep.mubr.f32.mxu0 0.0
    %607 = vmatmul.mubr.f32.gmra.mrb[0].mxu0 %v540
    %v608 = vpop.f32.mrb[0].mxu0
    %v609 = vadd.f32 0.0, %v608
    %v610 = vpop.f32.mrb[0].mxu0
    %611 = vdwg.mxu0
    %612 = vrot.lane.b32.xlu0 %v336, 64
    %v613 = vpop.permute.xlu0 %612
    %v616 = vsel %vm513, %v535, 0
    %618 = vmatprep.subr.mxu0 0.0
    %619 = vmatpush1.msra.mxu0 %v613
    %620 = vmatprep.subr.mxu0 0.0
    %621 = vmatpush1.msra.mxu0 0.0
    %622 = vmatprep.subr.mxu0 0.0
    %623 = vmatpush1.msra.mxu0 0.0
    %624 = vmatprep.subr.mxu0 0.0
    %625 = vmatpush1.msra.mxu0 0.0
    %626 = vmatprep.subr.mxu0 0.0
    %627 = vmatpush1.msra.mxu0 0.0
    %628 = vmatprep.subr.mxu0 0.0
    %629 = vmatpush1.msra.mxu0 0.0
    %630 = vmatprep.subr.mxu0 0.0
    %631 = vmatpush1.msra.mxu0 0.0
    %632 = vmatprep.subr.mxu0 0.0
    %633 = vmatpush1.msra.mxu0 0.0
    %634 = vmatprep.subr.mxu0 0.0
    %635 = vmatpush1.msra.mxu0 0.0
    %636 = vmatprep.subr.mxu0 0.0
    %637 = vmatpush1.msra.mxu0 0.0
    %638 = vmatprep.subr.mxu0 0.0
    %639 = vmatpush1.msra.mxu0 0.0
    %640 = vmatprep.subr.mxu0 0.0
    %641 = vmatpush1.msra.mxu0 0.0
    %642 = vmatprep.subr.mxu0 0.0
    %643 = vmatpush1.msra.mxu0 0.0
    %644 = vmatprep.subr.mxu0 0.0
    %645 = vmatpush1.msra.mxu0 0.0
    %646 = vmatprep.subr.mxu0 0.0
    %647 = vmatpush1.msra.mxu0 0.0
    %648 = vmatprep.subr.mxu0 0.0
    %649 = vmatpush1.msra.mxu0 0.0
    %650 = vmatprep.subr.mxu0 0.0
    %651 = vmatpush1.msra.mxu0 0.0
    %652 = vmatprep.subr.mxu0 0.0
    %653 = vmatpush1.msra.mxu0 0.0
    %654 = vmatprep.subr.mxu0 0.0
    %655 = vmatpush1.msra.mxu0 0.0
    %656 = vmatprep.subr.mxu0 0.0
    %657 = vmatpush1.msra.mxu0 0.0
    %658 = vmatprep.subr.mxu0 0.0
    %659 = vmatpush1.msra.mxu0 0.0
    %660 = vmatprep.subr.mxu0 0.0
    %661 = vmatpush1.msra.mxu0 0.0
    %662 = vmatprep.subr.mxu0 0.0
    %663 = vmatpush1.msra.mxu0 0.0
    %664 = vmatprep.subr.mxu0 0.0
    %665 = vmatpush1.msra.mxu0 0.0
    %666 = vmatprep.subr.mxu0 0.0
    %667 = vmatpush1.msra.mxu0 0.0
    %668 = vmatprep.subr.mxu0 0.0
    %669 = vmatpush1.msra.mxu0 0.0
    %670 = vmatprep.subr.mxu0 0.0
    %671 = vmatpush1.msra.mxu0 0.0
    %672 = vmatprep.subr.mxu0 0.0
    %673 = vmatpush1.msra.mxu0 0.0
    %674 = vmatprep.subr.mxu0 0.0
    %675 = vmatpush1.msra.mxu0 0.0
    %676 = vmatprep.subr.mxu0 0.0
    %677 = vmatpush1.msra.mxu0 0.0
    %678 = vmatprep.subr.mxu0 0.0
    %679 = vmatpush1.msra.mxu0 0.0
    %680 = vmatprep.subr.mxu0 0.0
    %681 = vmatpush1.msra.mxu0 0.0
    %682 = vmatprep.mubr.f32.mxu0 0.0
    %683 = vmatmul.mubr.f32.gmra.mrb[0].mxu0 %v616
    %v684 = vpop.f32.mrb[0].mxu0
    %v685 = vadd.f32 0.0, %v684
    %v686 = vpop.f32.mrb[0].mxu0
    %687 = vdwg.mxu0
    %692 = vrot.lane.b32.xlu0 %v44, 32
    %v693 = vpop.permute.xlu0 %692
    %694 = vrot.lane.b32.xlu0 %v46, 32
    %v695 = vpop.permute.xlu0 %694
    %696 = vrot.lane.b32.xlu0 %v48, 32
    %v697 = vpop.permute.xlu0 %696
    %698 = vrot.lane.b32.xlu0 %v50, 32
    %v699 = vpop.permute.xlu0 %698
    %705 = vrot.lane.b32.xlu0 %v257, 32
    %v706 = vpop.permute.xlu0 %705
    %v709 = vsel %vm214, %v609, 0
    %v712 = vsel %vm214, %v685, 0
    %714 = vmatprep.subr.mxu0 0.0
    %715 = vmatpush1.msra.mxu0 %v693
    %716 = vmatprep.subr.mxu0 0.0
    %717 = vmatpush1.msra.mxu0 %v695
    %718 = vmatprep.subr.mxu0 0.0
    %719 = vmatpush1.msra.mxu0 %v697
    %720 = vmatprep.subr.mxu0 0.0
    %721 = vmatpush1.msra.mxu0 %v699
    %722 = vmatprep.subr.mxu0 0.0
    %723 = vmatpush1.msra.mxu0 0.0
    %724 = vmatprep.subr.mxu0 0.0
    %725 = vmatpush1.msra.mxu0 0.0
    %726 = vmatprep.subr.mxu0 0.0
    %727 = vmatpush1.msra.mxu0 0.0
    %728 = vmatprep.subr.mxu0 0.0
    %729 = vmatpush1.msra.mxu0 0.0
    %730 = vmatprep.subr.mxu0 0.0
    %731 = vmatpush1.msra.mxu0 0.0
    %732 = vmatprep.subr.mxu0 0.0
    %733 = vmatpush1.msra.mxu0 0.0
    %734 = vmatprep.subr.mxu0 0.0
    %735 = vmatpush1.msra.mxu0 0.0
    %736 = vmatprep.subr.mxu0 0.0
    %737 = vmatpush1.msra.mxu0 0.0
    %738 = vmatprep.subr.mxu0 0.0
    %739 = vmatpush1.msra.mxu0 0.0
    %740 = vmatprep.subr.mxu0 0.0
    %741 = vmatpush1.msra.mxu0 0.0
    %742 = vmatprep.subr.mxu0 0.0
    %743 = vmatpush1.msra.mxu0 0.0
    %744 = vmatprep.subr.mxu0 0.0
    %745 = vmatpush1.msra.mxu0 0.0
    %746 = vmatprep.subr.mxu0 0.0
    %747 = vmatpush1.msra.mxu0 0.0
    %748 = vmatprep.subr.mxu0 0.0
    %749 = vmatpush1.msra.mxu0 0.0
    %750 = vmatprep.subr.mxu0 0.0
    %751 = vmatpush1.msra.mxu0 0.0
    %752 = vmatprep.subr.mxu0 0.0
    %753 = vmatpush1.msra.mxu0 0.0
    %754 = vmatprep.subr.mxu0 0.0
    %755 = vmatpush1.msra.mxu0 0.0
    %756 = vmatprep.subr.mxu0 0.0
    %757 = vmatpush1.msra.mxu0 0.0
    %758 = vmatprep.subr.mxu0 0.0
    %759 = vmatpush1.msra.mxu0 0.0
    %760 = vmatprep.subr.mxu0 0.0
    %761 = vmatpush1.msra.mxu0 0.0
    %762 = vmatprep.subr.mxu0 0.0
    %763 = vmatpush1.msra.mxu0 0.0
    %764 = vmatprep.subr.mxu0 0.0
    %765 = vmatpush1.msra.mxu0 0.0
    %766 = vmatprep.subr.mxu0 0.0
    %767 = vmatpush1.msra.mxu0 0.0
    %768 = vmatprep.subr.mxu0 0.0
    %769 = vmatpush1.msra.mxu0 0.0
    %770 = vmatprep.subr.mxu0 0.0
    %771 = vmatpush1.msra.mxu0 0.0
    %772 = vmatprep.subr.mxu0 0.0
    %773 = vmatpush1.msra.mxu0 0.0
    %774 = vmatprep.subr.mxu0 0.0
    %775 = vmatpush1.msra.mxu0 0.0
    %776 = vmatprep.subr.mxu0 0.0
    %777 = vmatpush1.msra.mxu0 0.0
    %778 = vmatprep.mubr.f32.mxu0 0.0
    %779 = vmatmul.mubr.f32.gmra.mrb[0].mxu0 %v709
    %v780 = vpop.f32.mrb[0].mxu0
    %v781 = vadd.f32 %v706, %v780
    %v782 = vpop.f32.mrb[0].mxu0
    %783 = vmatprep.mubr.f32.mxu0 0.0
    %784 = vmatmul.mubr.f32.gmra.mrb[0].mxu0 %v712
    %v785 = vpop.f32.mrb[0].mxu0
    %v786 = vadd.f32 %v706, %v785
    %v787 = vpop.f32.mrb[0].mxu0
    %788 = vdwg.mxu0
    %v789 = vadd.f32 %v252, %v781
    %v790 = vadd.f32 %v253, %v786
    %v791 = vsel %vm214, %v789, 0.0
    %792 = vadd.xlane.f32.xlu0 %v791
    %v793 = vpop.xlane.xlu0 %792
    %v794 = vsel %vm214, %v790, 0.0
    %795 = vadd.xlane.f32.xlu0 %v794
    %v796 = vpop.xlane.xlu0 %795
    %v797 = vmul.f32 %v793, %v221
    %v798 = vmul.f32 %v796, %v221
    %v799 = vsub.f32 %v789, %v797
    %v800 = vsub.f32 %v790, %v798
    %v801 = vmul.f32 %v799, %v799
    %v802 = vmul.f32 %v800, %v800
    %v803 = vsel %vm214, %v801, 0.0
    %804 = vadd.xlane.f32.xlu0 %v803
    %v805 = vpop.xlane.xlu0 %804
    %v806 = vsel %vm214, %v802, 0.0
    %807 = vadd.xlane.f32.xlu0 %v806
    %v808 = vpop.xlane.xlu0 %807
    %v809 = vmul.f32 %v805, %v221
    %v810 = vmul.f32 %v808, %v221
    %v811 = vadd.f32 %v809, 1e-12
    %v812 = vadd.f32 %v810, 1e-12
    %v813 = vrsqrt.pop %v811
    %v814 = vrsqrt.pop %v812
    %v815 = vmul.f32 %v799, %v813
    %v816 = vmul.f32 %v800, %v814
    %v817 = vlaneseq
    %v818 = vshrl.u32 %v817, 7
    %v819 = vsub.s32 2, %v818
    %v820 = vrot.slane %v43, %v819
    %v821 = vmul.f32 %v815, %v820
    %v822 = vmul.f32 %v816, %v820
    %v823 = vlaneseq
    %v824 = vshrl.u32 %v823, 7
    %v825 = vsub.s32 3, %v824
    %v826 = vrot.slane %v43, %v825
    %v827 = vadd.f32 %v821, %v826
    %v828 = vadd.f32 %v822, %v826
    %v829 = vlaneseq
    %v830 = vshrl.u32 %v829, 7
    %v831 = vsub.s32 0, %v830
    %v832 = vrot.slane %v53, %v831
    %v834 = vsel %vm214, %v827, 0
    %v837 = vsel %vm214, %v828, 0
    %839 = vmatprep.subr.mxu0 0.0
    %840 = vmatpush1.msra.mxu0 %v45
    %841 = vmatprep.subr.mxu0 0.0
    %842 = vmatpush1.msra.mxu0 %v47
    %843 = vmatprep.subr.mxu0 0.0
    %844 = vmatpush1.msra.mxu0 %v49
    %845 = vmatprep.subr.mxu0 0.0
    %846 = vmatpush1.msra.mxu0 %v51
    %847 = vmatprep.subr.mxu0 0.0
    %848 = vmatpush1.msra.mxu0 0.0
    %849 = vmatprep.subr.mxu0 0.0
    %850 = vmatpush1.msra.mxu0 0.0
    %851 = vmatprep.subr.mxu0 0.0
    %852 = vmatpush1.msra.mxu0 0.0
    %853 = vmatprep.subr.mxu0 0.0
    %854 = vmatpush1.msra.mxu0 0.0
    %855 = vmatprep.subr.mxu0 0.0
    %856 = vmatpush1.msra.mxu0 0.0
    %857 = vmatprep.subr.mxu0 0.0
    %858 = vmatpush1.msra.mxu0 0.0
    %859 = vmatprep.subr.mxu0 0.0
    %860 = vmatpush1.msra.mxu0 0.0
    %861 = vmatprep.subr.mxu0 0.0
    %862 = vmatpush1.msra.mxu0 0.0
    %863 = vmatprep.subr.mxu0 0.0
    %864 = vmatpush1.msra.mxu0 0.0
    %865 = vmatprep.subr.mxu0 0.0
    %866 = vmatpush1.msra.mxu0 0.0
    %867 = vmatprep.subr.mxu0 0.0
    %868 = vmatpush1.msra.mxu0 0.0
    %869 = vmatprep.subr.mxu0 0.0
    %870 = vmatpush1.msra.mxu0 0.0
    %871 = vmatprep.subr.mxu0 0.0
    %872 = vmatpush1.msra.mxu0 0.0
    %873 = vmatprep.subr.mxu0 0.0
    %874 = vmatpush1.msra.mxu0 0.0
    %875 = vmatprep.subr.mxu0 0.0
    %876 = vmatpush1.msra.mxu0 0.0
    %877 = vmatprep.subr.mxu0 0.0
    %878 = vmatpush1.msra.mxu0 0.0
    %879 = vmatprep.subr.mxu0 0.0
    %880 = vmatpush1.msra.mxu0 0.0
    %881 = vmatprep.subr.mxu0 0.0
    %882 = vmatpush1.msra.mxu0 0.0
    %883 = vmatprep.subr.mxu0 0.0
    %884 = vmatpush1.msra.mxu0 0.0
    %885 = vmatprep.subr.mxu0 0.0
    %886 = vmatpush1.msra.mxu0 0.0
    %887 = vmatprep.subr.mxu0 0.0
    %888 = vmatpush1.msra.mxu0 0.0
    %889 = vmatprep.subr.mxu0 0.0
    %890 = vmatpush1.msra.mxu0 0.0
    %891 = vmatprep.subr.mxu0 0.0
    %892 = vmatpush1.msra.mxu0 0.0
    %893 = vmatprep.subr.mxu0 0.0
    %894 = vmatpush1.msra.mxu0 0.0
    %895 = vmatprep.subr.mxu0 0.0
    %896 = vmatpush1.msra.mxu0 0.0
    %897 = vmatprep.subr.mxu0 0.0
    %898 = vmatpush1.msra.mxu0 0.0
    %899 = vmatprep.subr.mxu0 0.0
    %900 = vmatpush1.msra.mxu0 0.0
    %901 = vmatprep.subr.mxu0 0.0
    %902 = vmatpush1.msra.mxu0 0.0
    %903 = vmatprep.mubr.f32.mxu0 0.0
    %904 = vmatmul.mubr.f32.gmra.mrb[0].mxu0 %v834
    %v905 = vpop.f32.mrb[0].mxu0
    %v906 = vadd.f32 %v832, %v905
    %v907 = vpop.f32.mrb[0].mxu0
    %908 = vmatprep.mubr.f32.mxu0 0.0
    %909 = vmatmul.mubr.f32.gmra.mrb[0].mxu0 %v837
    %v910 = vpop.f32.mrb[0].mxu0
    %v911 = vadd.f32 %v832, %v910
    %v912 = vpop.f32.mrb[0].mxu0
    %913 = vdwg.mxu0
    %v914 = vmul.f32 %v906, %v906
    %v915 = vmul.f32 %v911, %v911
    %v916 = vmul.f32 %v906, %v914
    %v917 = vmul.f32 %v911, %v915
    %v918 = vmul.f32 %v916, 0.044715
    %v919 = vmul.f32 %v917, 0.044715
    %v920 = vadd.f32 %v906, %v918
    %v921 = vadd.f32 %v911, %v919
    %v922 = vmul.f32 %v920, 0.7978846
    %v923 = vmul.f32 %v921, 0.7978846
    %v924 = vtanh.pop %v922
    %v925 = vtanh.pop %v923
    %v926 = vadd.f32 %v924, 1.0
    %v927 = vadd.f32 %v925, 1.0
    %v928 = vmul.f32 %v926, 0.5
    %v929 = vmul.f32 %v927, 0.5
    %v930 = vmul.f32 %v906, %v928
    %v931 = vmul.f32 %v911, %v929
    %v932 = vlaneseq
    %v933 = vshrl.u32 %v932, 7
    %v934 = vsub.s32 0, %v933
    %v935 = vrot.slane %v70, %v934
    %936 = vmatprep.subr.mxu0 0.0
    %937 = vmatpush1.msra.mxu0 %v54
    %938 = vmatprep.subr.mxu0 0.0
    %939 = vmatpush1.msra.mxu0 %v55
    %940 = vmatprep.subr.mxu0 0.0
    %941 = vmatpush1.msra.mxu0 %v56
    %942 = vmatprep.subr.mxu0 0.0
    %943 = vmatpush1.msra.mxu0 %v57
    %944 = vmatprep.subr.mxu0 0.0
    %945 = vmatpush1.msra.mxu0 %v58
    %946 = vmatprep.subr.mxu0 0.0
    %947 = vmatpush1.msra.mxu0 %v59
    %948 = vmatprep.subr.mxu0 0.0
    %949 = vmatpush1.msra.mxu0 %v60
    %950 = vmatprep.subr.mxu0 0.0
    %951 = vmatpush1.msra.mxu0 %v61
    %952 = vmatprep.subr.mxu0 0.0
    %953 = vmatpush1.msra.mxu0 %v62
    %954 = vmatprep.subr.mxu0 0.0
    %955 = vmatpush1.msra.mxu0 %v63
    %956 = vmatprep.subr.mxu0 0.0
    %957 = vmatpush1.msra.mxu0 %v64
    %958 = vmatprep.subr.mxu0 0.0
    %959 = vmatpush1.msra.mxu0 %v65
    %960 = vmatprep.subr.mxu0 0.0
    %961 = vmatpush1.msra.mxu0 %v66
    %962 = vmatprep.subr.mxu0 0.0
    %963 = vmatpush1.msra.mxu0 %v67
    %964 = vmatprep.subr.mxu0 0.0
    %965 = vmatpush1.msra.mxu0 %v68
    %966 = vmatprep.subr.mxu0 0.0
    %967 = vmatpush1.msra.mxu0 %v69
    %968 = vmatprep.subr.mxu0 0.0
    %969 = vmatpush1.msra.mxu0 0.0
    %970 = vmatprep.subr.mxu0 0.0
    %971 = vmatpush1.msra.mxu0 0.0
    %972 = vmatprep.subr.mxu0 0.0
    %973 = vmatpush1.msra.mxu0 0.0
    %974 = vmatprep.subr.mxu0 0.0
    %975 = vmatpush1.msra.mxu0 0.0
    %976 = vmatprep.subr.mxu0 0.0
    %977 = vmatpush1.msra.mxu0 0.0
    %978 = vmatprep.subr.mxu0 0.0
    %979 = vmatpush1.msra.mxu0 0.0
    %980 = vmatprep.subr.mxu0 0.0
    %981 = vmatpush1.msra.mxu0 0.0
    %982 = vmatprep.subr.mxu0 0.0
    %983 = vmatpush1.msra.mxu0 0.0
    %984 = vmatprep.subr.mxu0 0.0
    %985 = vmatpush1.msra.mxu0 0.0
    %986 = vmatprep.subr.mxu0 0.0
    %987 = vmatpush1.msra.mxu0 0.0
    %988 = vmatprep.subr.mxu0 0.0
    %989 = vmatpush1.msra.mxu0 0.0
    %990 = vmatprep.subr.mxu0 0.0
    %991 = vmatpush1.msra.mxu0 0.0
    %992 = vmatprep.subr.mxu0 0.0
    %993 = vmatpush1.msra.mxu0 0.0
    %994 = vmatprep.subr.mxu0 0.0
    %995 = vmatpush1.msra.mxu0 0.0
    %996 = vmatprep.subr.mxu0 0.0
    %997 = vmatpush1.msra.mxu0 0.0
    %998 = vmatprep.subr.mxu0 0.0
    %999 = vmatpush1.msra.mxu0 0.0
    %1000 = vmatprep.mubr.f32.mxu0 0.0
    %1001 = vmatmul.mubr.f32.gmra.mrb[0].mxu0 %v930
    %v1002 = vpop.f32.mrb[0].mxu0
    %v1003 = vadd.f32 %v935, %v1002
    %v1004 = vpop.f32.mrb[0].mxu0
    %1005 = vmatprep.mubr.f32.mxu0 0.0
    %1006 = vmatmul.mubr.f32.gmra.mrb[0].mxu0 %v931
    %v1007 = vpop.f32.mrb[0].mxu0
    %v1008 = vadd.f32 %v935, %v1007
    %v1009 = vpop.f32.mrb[0].mxu0
    %1010 = vdwg.mxu0
    %v1011 = vadd.f32 %v827, %v1003
    %v1012 = vadd.f32 %v828, %v1008
    %v1013 = vsel %vm214, %v1011, 0.0
    %1014 = vadd.xlane.f32.xlu0 %v1013
    %v1015 = vpop.xlane.xlu0 %1014
    %v1016 = vsel %vm214, %v1012, 0.0
    %1017 = vadd.xlane.f32.xlu0 %v1016
    %v1018 = vpop.xlane.xlu0 %1017
    %v1019 = vmul.f32 %v1015, %v221
    %v1020 = vmul.f32 %v1018, %v221
    %v1021 = vsub.f32 %v1011, %v1019
    %v1022 = vsub.f32 %v1012, %v1020
    %v1023 = vmul.f32 %v1021, %v1021
    %v1024 = vmul.f32 %v1022, %v1022
    %v1025 = vsel %vm214, %v1023, 0.0
    %1026 = vadd.xlane.f32.xlu0 %v1025
    %v1027 = vpop.xlane.xlu0 %1026
    %v1028 = vsel %vm214, %v1024, 0.0
    %1029 = vadd.xlane.f32.xlu0 %v1028
    %v1030 = vpop.xlane.xlu0 %1029
    %v1031 = vmul.f32 %v1027, %v221
    %v1032 = vmul.f32 %v1030, %v221
    %v1033 = vadd.f32 %v1031, 1e-12
    %v1034 = vadd.f32 %v1032, 1e-12
    %v1035 = vrsqrt.pop %v1033
    %v1036 = vrsqrt.pop %v1034
    %v1037 = vmul.f32 %v1021, %v1035
    %v1038 = vmul.f32 %v1022, %v1036
    %v1039 = vlaneseq
    %v1040 = vshrl.u32 %v1039, 7
    %v1041 = vsub.s32 4, %v1040
    %v1042 = vrot.slane %v43, %v1041
    %v1043 = vmul.f32 %v1037, %v1042
    %v1044 = vmul.f32 %v1038, %v1042
    %v1045 = vlaneseq
    %v1046 = vshrl.u32 %v1045, 7
    %v1047 = vsub.s32 5, %v1046
    %v1048 = vrot.slane %v43, %v1047
    %v1049 = vadd.f32 %v1043, %v1048
    %v1050 = vadd.f32 %v1044, %v1048
    %v1052 = vrot.slane %v43, 6
    %v1054 = vsel %vm214, %v1049, 0
    %v1057 = vsel %vm214, %v1050, 0
    %v1059 = vsel %vm214, %v1052, 0
    %1061 = vmatprep.subr.mxu0 0.0
    %1062 = vmatpush1.xpose.msra.mxu0 %v1059
    %1063 = vmatprep.subr.mxu0 0.0
    %1064 = vmatpush1.xpose.msra.mxu0 0.0
    %1065 = vmatprep.subr.mxu0 0.0
    %1066 = vmatpush1.xpose.msra.mxu0 0.0
    %1067 = vmatprep.subr.mxu0 0.0
    %1068 = vmatpush1.xpose.msra.mxu0 0.0
    %1069 = vmatprep.subr.mxu0 0.0
    %1070 = vmatpush1.xpose.msra.mxu0 0.0
    %1071 = vmatprep.subr.mxu0 0.0
    %1072 = vmatpush1.xpose.msra.mxu0 0.0
    %1073 = vmatprep.subr.mxu0 0.0
    %1074 = vmatpush1.xpose.msra.mxu0 0.0
    %1075 = vmatprep.subr.mxu0 0.0
    %1076 = vmatpush1.xpose.msra.mxu0 0.0
    %1077 = vmatprep.subr.mxu0 0.0
    %1078 = vmatpush1.xpose.msra.mxu0 0.0
    %1079 = vmatprep.subr.mxu0 0.0
    %1080 = vmatpush1.xpose.msra.mxu0 0.0
    %1081 = vmatprep.subr.mxu0 0.0
    %1082 = vmatpush1.xpose.msra.mxu0 0.0
    %1083 = vmatprep.subr.mxu0 0.0
    %1084 = vmatpush1.xpose.msra.mxu0 0.0
    %1085 = vmatprep.subr.mxu0 0.0
    %1086 = vmatpush1.xpose.msra.mxu0 0.0
    %1087 = vmatprep.subr.mxu0 0.0
    %1088 = vmatpush1.xpose.msra.mxu0 0.0
    %1089 = vmatprep.subr.mxu0 0.0
    %1090 = vmatpush1.xpose.msra.mxu0 0.0
    %1091 = vmatprep.subr.mxu0 0.0
    %1092 = vmatpush1.xpose.msra.mxu0 0.0
    %1093 = vmatprep.subr.mxu0 0.0
    %1094 = vmatpush1.xpose.msra.mxu0 0.0
    %1095 = vmatprep.subr.mxu0 0.0
    %1096 = vmatpush1.xpose.msra.mxu0 0.0
    %1097 = vmatprep.subr.mxu0 0.0
    %1098 = vmatpush1.xpose.msra.mxu0 0.0
    %1099 = vmatprep.subr.mxu0 0.0
    %1100 = vmatpush1.xpose.msra.mxu0 0.0
    %1101 = vmatprep.subr.mxu0 0.0
    %1102 = vmatpush1.xpose.msra.mxu0 0.0
    %1103 = vmatprep.subr.mxu0 0.0
    %1104 = vmatpush1.xpose.msra.mxu0 0.0
    %1105 = vmatprep.subr.mxu0 0.0
    %1106 = vmatpush1.xpose.msra.mxu0 0.0
    %1107 = vmatprep.subr.mxu0 0.0
    %1108 = vmatpush1.xpose.msra.mxu0 0.0
    %1109 = vmatprep.subr.mxu0 0.0
    %1110 = vmatpush1.xpose.msra.mxu0 0.0
    %1111 = vmatprep.subr.mxu0 0.0
    %1112 = vmatpush1.xpose.msra.mxu0 0.0
    %1113 = vmatprep.subr.mxu0 0.0
    %1114 = vmatpush1.xpose.msra.mxu0 0.0
    %1115 = vmatprep.subr.mxu0 0.0
    %1116 = vmatpush1.xpose.msra.mxu0 0.0
    %1117 = vmatprep.subr.mxu0 0.0
    %1118 = vmatpush1.xpose.msra.mxu0 0.0
    %1119 = vmatprep.subr.mxu0 0.0
    %1120 = vmatpush1.xpose.msra.mxu0 0.0
    %1121 = vmatprep.subr.mxu0 0.0
    %1122 = vmatpush1.xpose.msra.mxu0 0.0
    %1123 = vmatprep.subr.mxu0 0.0
    %1124 = vmatpush1.xpose.msra.mxu0 0.0
    %1125 = vmatprep.mubr.f32.mxu0 0.0
    %1126 = vmatmul.mubr.f32.gmra.mrb[0].mxu0 %v1054
    %v1127 = vpop.f32.mrb[0].mxu0
    %v1128 = vadd.f32 0.0, %v1127
    %v1129 = vpop.f32.mrb[0].mxu0
    %1130 = vmatprep.mubr.f32.mxu0 0.0
    %1131 = vmatmul.mubr.f32.gmra.mrb[0].mxu0 %v1057
    %v1132 = vpop.f32.mrb[0].mxu0
    %v1133 = vadd.f32 0.0, %v1132
    %v1134 = vpop.f32.mrb[0].mxu0
    %1135 = vdwg.mxu0
    %vm1136 = vcmp.eq.s32.totalorder %v91, 0
    %1138 = vset.pattern.permute.xlu0 0
    %1139 = vperm.xlu0 %1138, %v1128
    %v1140 = vpop.permute.xlu0 %1139
    %v1142 = vsel %vm1136, %v1140, 0.0
    %1143 = vset.pattern.permute.xlu0 1
    %1144 = vperm.xlu0 %1143, %v1128
    %v1145 = vpop.permute.xlu0 %1144
    %v1147 = vsel %vm1136, %v1145, 0.0
    %vm1148 = vcmp.eq.s32.totalorder %v91, 1
    %1150 = vset.pattern.permute.xlu0 0
    %1151 = vperm.xlu0 %1150, %v1133
    %v1152 = vpop.permute.xlu0 %1151
    %v1154 = vsel %vm1148, %v1152, %v1142
    %1155 = vset.pattern.permute.xlu0 1
    %1156 = vperm.xlu0 %1155, %v1133
    %v1157 = vpop.permute.xlu0 %1156
    %v1159 = vsel %vm1148, %v1157, %v1147
    %s1160 = sld [smem:[#allocation2 + $0x8]]
    %v1161 = vstv %s1160
    %v1162 = vadd.f32 %v1154, %v1161
    %s1163 = sld [smem:[#allocation2 + $0x9]]
    %v1164 = vstv %s1163
    %v1165 = vadd.f32 %v1159, %v1164
    %v1166 = vlaneseq
    %v1167 = vshrl.u32 %v1166, 7
    %vm1168 = vcmp.eq.s32.totalorder %v1167, %v91
    %v1169 = vsel %vm1168, 1, 0
    %v1170 = vcvt.s32.f32 %v1169
    %v1172 = vsel %vm513, %v1170, 0
    %v1175 = vsel %vm513, %v340, 0
    %1177 = vmatprep.subr.mxu0 0.0
    %1178 = vmatpush1.xpose.msra.mxu0 %v1175
    %1179 = vmatprep.subr.mxu0 0.0
    %1180 = vmatpush1.xpose.msra.mxu0 0.0
    %1181 = vmatprep.subr.mxu0 0.0
    %1182 = vmatpush1.xpose.msra.mxu0 0.0
    %1183 = vmatprep.subr.mxu0 0.0
    %1184 = vmatpush1.xpose.msra.mxu0 0.0
    %1185 = vmatprep.subr.mxu0 0.0
    %1186 = vmatpush1.xpose.msra.mxu0 0.0
    %1187 = vmatprep.subr.mxu0 0.0
    %1188 = vmatpush1.xpose.msra.mxu0 0.0
    %1189 = vmatprep.subr.mxu0 0.0
    %1190 = vmatpush1.xpose.msra.mxu0 0.0
    %1191 = vmatprep.subr.mxu0 0.0
    %1192 = vmatpush1.xpose.msra.mxu0 0.0
    %1193 = vmatprep.subr.mxu0 0.0
    %1194 = vmatpush1.xpose.msra.mxu0 0.0
    %1195 = vmatprep.subr.mxu0 0.0
    %1196 = vmatpush1.xpose.msra.mxu0 0.0
    %1197 = vmatprep.subr.mxu0 0.0
    %1198 = vmatpush1.xpose.msra.mxu0 0.0
    %1199 = vmatprep.subr.mxu0 0.0
    %1200 = vmatpush1.xpose.msra.mxu0 0.0
    %1201 = vmatprep.subr.mxu0 0.0
    %1202 = vmatpush1.xpose.msra.mxu0 0.0
    %1203 = vmatprep.subr.mxu0 0.0
    %1204 = vmatpush1.xpose.msra.mxu0 0.0
    %1205 = vmatprep.subr.mxu0 0.0
    %1206 = vmatpush1.xpose.msra.mxu0 0.0
    %1207 = vmatprep.subr.mxu0 0.0
    %1208 = vmatpush1.xpose.msra.mxu0 0.0
    %1209 = vmatprep.subr.mxu0 0.0
    %1210 = vmatpush1.xpose.msra.mxu0 0.0
    %1211 = vmatprep.subr.mxu0 0.0
    %1212 = vmatpush1.xpose.msra.mxu0 0.0
    %1213 = vmatprep.subr.mxu0 0.0
    %1214 = vmatpush1.xpose.msra.mxu0 0.0
    %1215 = vmatprep.subr.mxu0 0.0
    %1216 = vmatpush1.xpose.msra.mxu0 0.0
    %1217 = vmatprep.subr.mxu0 0.0
    %1218 = vmatpush1.xpose.msra.mxu0 0.0
    %1219 = vmatprep.subr.mxu0 0.0
    %1220 = vmatpush1.xpose.msra.mxu0 0.0
    %1221 = vmatprep.subr.mxu0 0.0
    %1222 = vmatpush1.xpose.msra.mxu0 0.0
    %1223 = vmatprep.subr.mxu0 0.0
    %1224 = vmatpush1.xpose.msra.mxu0 0.0
    %1225 = vmatprep.subr.mxu0 0.0
    %1226 = vmatpush1.xpose.msra.mxu0 0.0
    %1227 = vmatprep.subr.mxu0 0.0
    %1228 = vmatpush1.xpose.msra.mxu0 0.0
    %1229 = vmatprep.subr.mxu0 0.0
    %1230 = vmatpush1.xpose.msra.mxu0 0.0
    %1231 = vmatprep.subr.mxu0 0.0
    %1232 = vmatpush1.xpose.msra.mxu0 0.0
    %1233 = vmatprep.subr.mxu0 0.0
    %1234 = vmatpush1.xpose.msra.mxu0 0.0
    %1235 = vmatprep.subr.mxu0 0.0
    %1236 = vmatpush1.xpose.msra.mxu0 0.0
    %1237 = vmatprep.subr.mxu0 0.0
    %1238 = vmatpush1.xpose.msra.mxu0 0.0
    %1239 = vmatprep.subr.mxu0 0.0
    %1240 = vmatpush1.xpose.msra.mxu0 0.0
    %1241 = vmatprep.mubr.f32.mxu0 0.0
    %1242 = vmatmul.mubr.f32.gmra.mrb[0].mxu0 %v1172
    %v1243 = vpop.f32.mrb[0].mxu0
    %v1244 = vadd.f32 0.0, %v1243
    %v1245 = vpop.f32.mrb[0].mxu0
    %1246 = vdwg.mxu0
    %v1247 = vld [vmem:[%s2] sm:$0x1]
    %v1248 = vld [vmem:[%s2 + $0x1] sm:$0x1]
    %vm1249 = vcmp.ge.s32.totalorder %v1247, 0
    %vm1250 = vcmp.lt.s32.totalorder %v1247, 8
    %vm1251 = vmand %vm1249, %vm1250
    %vm1252 = vcmp.ge.s32.totalorder %v1248, 0
    %vm1253 = vmand %vm1251, %vm1252
    %vm1254 = vcmp.lt.s32.totalorder %v1248, 8
    %vm1255 = vmand %vm1253, %vm1254
    %vm1256 = vcmp.le.s32.totalorder %v1247, %v1248
    %vm1257 = vmand %vm1255, %vm1256
    %v1258 = vlaneseq
    %v1259 = vshrl.u32 %v1258, 7
    %v1260 = vsub.s32 0, %v1259
    %v1261 = vrot.slane %v1247, %v1260
    %vm1262 = vcmp.ge.s32.totalorder %v1167, %v1261
    %v1263 = vsel %vm1257, 1, 0
    %v1264 = vlaneseq
    %v1265 = vshrl.u32 %v1264, 7
    %v1266 = vsub.s32 0, %v1265
    %v1267 = vrot.slane %v1263, %v1266
    %vm1268 = vcmp.eq.s32.totalorder %v1267, 1
    %vm1269 = vmand %vm1268, %vm1262
    %v1270 = vlaneseq
    %v1271 = vshrl.u32 %v1270, 7
    %v1272 = vsub.s32 0, %v1271
    %v1273 = vrot.slane %v1248, %v1272
    %vm1274 = vcmp.le.s32.totalorder %v1167, %v1273
    %vm1275 = vmand %vm1269, %vm1274
    %v1276 = vsel %vm1275, 1, 0
    %s1277 = sld [smem:[#allocation2]]
    %v1278 = vstv %s1277
    %s1279 = sld [smem:[#allocation2 + $0x1]]
    %v1280 = vstv %s1279
    %s1281 = sld [smem:[#allocation2 + $0x2]]
    %v1282 = vstv %s1281
    %s1283 = sld [smem:[#allocation2 + $0x3]]
    %v1284 = vstv %s1283
    %s1285 = sld [smem:[#allocation2 + $0x4]]
    %v1286 = vstv %s1285
    %s1287 = sld [smem:[#allocation2 + $0x5]]
    %v1288 = vstv %s1287
    %s1289 = sld [smem:[#allocation2 + $0x6]]
    %v1290 = vstv %s1289
    %s1291 = sld [smem:[#allocation2 + $0x7]]
    %v1292 = vstv %s1291
    %v1293 = vadd.f32 %v1162, %v1278
    %v1294 = vadd.f32 %v1165, %v1280
    %vm1295 = vcmp.eq.s32.totalorder %v1276, 1
    %v1296 = vsel %vm1295, %v1294, %v1293
    %v1297 = vadd.f32 %v1293, %v1286
    %v1298 = vadd.f32 %v1294, %v1290
    %v1299 = vmax.f32 %v1297, %v1298
    %v1300 = vsub.f32 %v1297, %v1299
    %v1301 = vmul.f32 %v1300, 1.442695
    %v1302 = vpow.pop %v1301
    %v1303 = vsub.f32 %v1298, %v1299
    %v1304 = vmul.f32 %v1303, 1.442695
    %v1305 = vpow.pop %v1304
    %v1306 = vadd.f32 %v1302, %v1305
    %v1307 = vlog2.pop %v1306
    %v1308 = vmul.f32 %v1307, 0.6931472
    %v1309 = vadd.f32 %v1299, %v1308
    %v1311 = vrot.slane %v1162, 1
    %v1313 = vadd.f32 %v1309, %v1311
    %v1314 = vadd.f32 %v1293, %v1288
    %v1315 = vadd.f32 %v1294, %v1292
    %v1316 = vmax.f32 %v1314, %v1315
    %v1317 = vsub.f32 %v1314, %v1316
    %v1318 = vmul.f32 %v1317, 1.442695
    %v1319 = vpow.pop %v1318
    %v1320 = vsub.f32 %v1315, %v1316
    %v1321 = vmul.f32 %v1320, 1.442695
    %v1322 = vpow.pop %v1321
    %v1323 = vadd.f32 %v1319, %v1322
    %v1324 = vlog2.pop %v1323
    %v1325 = vmul.f32 %v1324, 0.6931472
    %v1326 = vadd.f32 %v1316, %v1325
    %v1328 = vrot.slane %v1165, 1
    %v1330 = vadd.f32 %v1326, %v1328
    %vm1331 = vcmp.gt.f32.partialorder %v1244, 0.0
    %v1333 = vrot.slane %v1313, 7
    %v1336 = vrot.slane %v1293, 7
    %v1338 = vsel %vm1331, %v1333, %v1336
    %v1340 = vrot.slane %v1330, 7
    %v1343 = vrot.slane %v1294, 7
    %v1345 = vsel %vm1331, %v1340, %v1343
    %v1346 = vsel %vm1295, %v1292, %v1290
    %v1347 = vsel %vm1295, %v1288, %v1286
    %v1349 = vrot.slane %v1346, 1
    %v1352 = vrot.slane %v1347, 1
    %v1354 = vsel %vm1295, %v1349, %v1352
    %v1355 = vsel %vm1295, %v1165, %v1162
    %v1357 = vrot.slane %v1355, 1
    %v1359 = vadd.f32 %v1354, %v1357
    %v1361 = vrot.slane %v1244, 1
    %v1363 = vmul.f32 %v1359, %v1361
    %v1364 = vadd.f32 %v1296, %v1363
    %v1365 = vrot.slane %v1276, 7
    %v1366 = vsel %vm1331, %v1276, %v1365
    %v1367 = vadd.f32 %v1338, %v1286
    %v1368 = vadd.f32 %v1345, %v1290
    %v1369 = vmax.f32 %v1367, %v1368
    %v1370 = vsub.f32 %v1367, %v1369
    %v1371 = vmul.f32 %v1370, 1.442695
    %v1372 = vpow.pop %v1371
    %v1373 = vsub.f32 %v1368, %v1369
    %v1374 = vmul.f32 %v1373, 1.442695
    %v1375 = vpow.pop %v1374
    %v1376 = vadd.f32 %v1372, %v1375
    %v1377 = vlog2.pop %v1376
    %v1378 = vmul.f32 %v1377, 0.6931472
    %v1379 = vadd.f32 %v1369, %v1378
    %v1380 = vadd.f32 %v1379, %v1311
    %v1381 = vadd.f32 %v1338, %v1288
    %v1382 = vadd.f32 %v1345, %v1292
    %v1383 = vmax.f32 %v1381, %v1382
    %v1384 = vsub.f32 %v1381, %v1383
    %v1385 = vmul.f32 %v1384, 1.442695
    %v1386 = vpow.pop %v1385
    %v1387 = vsub.f32 %v1382, %v1383
    %v1388 = vmul.f32 %v1387, 1.442695
    %v1389 = vpow.pop %v1388
    %v1390 = vadd.f32 %v1386, %v1389
    %v1391 = vlog2.pop %v1390
    %v1392 = vmul.f32 %v1391, 0.6931472
    %v1393 = vadd.f32 %v1383, %v1392
    %v1394 = vadd.f32 %v1393, %v1328
    %v1396 = vrot.slane %v1380, 7
    %v1399 = vrot.slane %v1338, 7
    %v1401 = vsel %vm1331, %v1396, %v1399
    %v1403 = vrot.slane %v1394, 7
    %v1406 = vrot.slane %v1345, 7
    %v1408 = vsel %vm1331, %v1403, %v1406
    %v1410 = vrot.slane %v1363, 1
    %v1412 = vadd.f32 %v1364, %v1410
    %v1413 = vrot.slane %v1366, 7
    %v1414 = vsel %vm1331, %v1276, %v1413
    %v1415 = vadd.f32 %v1401, %v1286
    %v1416 = vadd.f32 %v1408, %v1290
    %v1417 = vmax.f32 %v1415, %v1416
    %v1418 = vsub.f32 %v1415, %v1417
    %v1419 = vmul.f32 %v1418, 1.442695
    %v1420 = vpow.pop %v1419
    %v1421 = vsub.f32 %v1416, %v1417
    %v1422 = vmul.f32 %v1421, 1.442695
    %v1423 = vpow.pop %v1422
    %v1424 = vadd.f32 %v1420, %v1423
    %v1425 = vlog2.pop %v1424
    %v1426 = vmul.f32 %v1425, 0.6931472
    %v1427 = vadd.f32 %v1417, %v1426
    %v1428 = vadd.f32 %v1427, %v1311
    %v1429 = vadd.f32 %v1401, %v1288
    %v1430 = vadd.f32 %v1408, %v1292
    %v1431 = vmax.f32 %v1429, %v1430
    %v1432 = vsub.f32 %v1429, %v1431
    %v1433 = vmul.f32 %v1432, 1.442695
    %v1434 = vpow.pop %v1433
    %v1435 = vsub.f32 %v1430, %v1431
    %v1436 = vmul.f32 %v1435, 1.442695
    %v1437 = vpow.pop %v1436
    %v1438 = vadd.f32 %v1434, %v1437
    %v1439 = vlog2.pop %v1438
    %v1440 = vmul.f32 %v1439, 0.6931472
    %v1441 = vadd.f32 %v1431, %v1440
    %v1442 = vadd.f32 %v1441, %v1328
    %v1444 = vrot.slane %v1428, 7
    %v1447 = vrot.slane %v1401, 7
    %v1449 = vsel %vm1331, %v1444, %v1447
    %v1451 = vrot.slane %v1442, 7
    %v1454 = vrot.slane %v1408, 7
    %v1456 = vsel %vm1331, %v1451, %v1454
    %v1457 = vrot.slane %v1363, 2
    %v1459 = vadd.f32 %v1412, %v1457
    %v1460 = vrot.slane %v1414, 7
    %v1461 = vsel %vm1331, %v1276, %v1460
    %v1462 = vadd.f32 %v1449, %v1286
    %v1463 = vadd.f32 %v1456, %v1290
    %v1464 = vmax.f32 %v1462, %v1463
    %v1465 = vsub.f32 %v1462, %v1464
    %v1466 = vmul.f32 %v1465, 1.442695
    %v1467 = vpow.pop %v1466
    %v1468 = vsub.f32 %v1463, %v1464
    %v1469 = vmul.f32 %v1468, 1.442695
    %v1470 = vpow.pop %v1469
    %v1471 = vadd.f32 %v1467, %v1470
    %v1472 = vlog2.pop %v1471
    %v1473 = vmul.f32 %v1472, 0.6931472
    %v1474 = vadd.f32 %v1464, %v1473
    %v1475 = vadd.f32 %v1474, %v1311
    %v1476 = vadd.f32 %v1449, %v1288
    %v1477 = vadd.f32 %v1456, %v1292
    %v1478 = vmax.f32 %v1476, %v1477
    %v1479 = vsub.f32 %v1476, %v1478
    %v1480 = vmul.f32 %v1479, 1.442695
    %v1481 = vpow.pop %v1480
    %v1482 = vsub.f32 %v1477, %v1478
    %v1483 = vmul.f32 %v1482, 1.442695
    %v1484 = vpow.pop %v1483
    %v1485 = vadd.f32 %v1481, %v1484
    %v1486 = vlog2.pop %v1485
    %v1487 = vmul.f32 %v1486, 0.6931472
    %v1488 = vadd.f32 %v1478, %v1487
    %v1489 = vadd.f32 %v1488, %v1328
    %v1491 = vrot.slane %v1475, 7
    %v1494 = vrot.slane %v1449, 7
    %v1496 = vsel %vm1331, %v1491, %v1494
    %v1498 = vrot.slane %v1489, 7
    %v1501 = vrot.slane %v1456, 7
    %v1503 = vsel %vm1331, %v1498, %v1501
    %v1504 = vrot.slane %v1363, 3
    %v1506 = vadd.f32 %v1459, %v1504
    %v1507 = vrot.slane %v1461, 7
    %v1508 = vsel %vm1331, %v1276, %v1507
    %v1509 = vadd.f32 %v1496, %v1286
    %v1510 = vadd.f32 %v1503, %v1290
    %v1511 = vmax.f32 %v1509, %v1510
    %v1512 = vsub.f32 %v1509, %v1511
    %v1513 = vmul.f32 %v1512, 1.442695
    %v1514 = vpow.pop %v1513
    %v1515 = vsub.f32 %v1510, %v1511
    %v1516 = vmul.f32 %v1515, 1.442695
    %v1517 = vpow.pop %v1516
    %v1518 = vadd.f32 %v1514, %v1517
    %v1519 = vlog2.pop %v1518
    %v1520 = vmul.f32 %v1519, 0.6931472
    %v1521 = vadd.f32 %v1511, %v1520
    %v1522 = vadd.f32 %v1521, %v1311
    %v1523 = vadd.f32 %v1496, %v1288
    %v1524 = vadd.f32 %v1503, %v1292
    %v1525 = vmax.f32 %v1523, %v1524
    %v1526 = vsub.f32 %v1523, %v1525
    %v1527 = vmul.f32 %v1526, 1.442695
    %v1528 = vpow.pop %v1527
    %v1529 = vsub.f32 %v1524, %v1525
    %v1530 = vmul.f32 %v1529, 1.442695
    %v1531 = vpow.pop %v1530
    %v1532 = vadd.f32 %v1528, %v1531
    %v1533 = vlog2.pop %v1532
    %v1534 = vmul.f32 %v1533, 0.6931472
    %v1535 = vadd.f32 %v1525, %v1534
    %v1536 = vadd.f32 %v1535, %v1328
    %v1538 = vrot.slane %v1522, 7
    %v1541 = vrot.slane %v1496, 7
    %v1543 = vsel %vm1331, %v1538, %v1541
    %v1545 = vrot.slane %v1536, 7
    %v1548 = vrot.slane %v1503, 7
    %v1550 = vsel %vm1331, %v1545, %v1548
    %v1551 = vrot.slane %v1363, 4
    %v1553 = vadd.f32 %v1506, %v1551
    %v1554 = vrot.slane %v1508, 7
    %v1555 = vsel %vm1331, %v1276, %v1554
    %v1556 = vadd.f32 %v1543, %v1286
    %v1557 = vadd.f32 %v1550, %v1290
    %v1558 = vmax.f32 %v1556, %v1557
    %v1559 = vsub.f32 %v1556, %v1558
    %v1560 = vmul.f32 %v1559, 1.442695
    %v1561 = vpow.pop %v1560
    %v1562 = vsub.f32 %v1557, %v1558
    %v1563 = vmul.f32 %v1562, 1.442695
    %v1564 = vpow.pop %v1563
    %v1565 = vadd.f32 %v1561, %v1564
    %v1566 = vlog2.pop %v1565
    %v1567 = vmul.f32 %v1566, 0.6931472
    %v1568 = vadd.f32 %v1558, %v1567
    %v1569 = vadd.f32 %v1568, %v1311
    %v1570 = vadd.f32 %v1543, %v1288
    %v1571 = vadd.f32 %v1550, %v1292
    %v1572 = vmax.f32 %v1570, %v1571
    %v1573 = vsub.f32 %v1570, %v1572
    %v1574 = vmul.f32 %v1573, 1.442695
    %v1575 = vpow.pop %v1574
    %v1576 = vsub.f32 %v1571, %v1572
    %v1577 = vmul.f32 %v1576, 1.442695
    %v1578 = vpow.pop %v1577
    %v1579 = vadd.f32 %v1575, %v1578
    %v1580 = vlog2.pop %v1579
    %v1581 = vmul.f32 %v1580, 0.6931472
    %v1582 = vadd.f32 %v1572, %v1581
    %v1583 = vadd.f32 %v1582, %v1328
    %v1585 = vrot.slane %v1569, 7
    %v1588 = vrot.slane %v1543, 7
    %v1590 = vsel %vm1331, %v1585, %v1588
    %v1592 = vrot.slane %v1583, 7
    %v1595 = vrot.slane %v1550, 7
    %v1597 = vsel %vm1331, %v1592, %v1595
    %v1598 = vrot.slane %v1363, 5
    %v1600 = vadd.f32 %v1553, %v1598
    %v1601 = vrot.slane %v1555, 7
    %v1602 = vsel %vm1331, %v1276, %v1601
    %v1603 = vadd.f32 %v1590, %v1286
    %v1604 = vadd.f32 %v1597, %v1290
    %v1605 = vmax.f32 %v1603, %v1604
    %v1606 = vsub.f32 %v1603, %v1605
    %v1607 = vmul.f32 %v1606, 1.442695
    %v1608 = vpow.pop %v1607
    %v1609 = vsub.f32 %v1604, %v1605
    %v1610 = vmul.f32 %v1609, 1.442695
    %v1611 = vpow.pop %v1610
    %v1612 = vadd.f32 %v1608, %v1611
    %v1613 = vlog2.pop %v1612
    %v1614 = vmul.f32 %v1613, 0.6931472
    %v1615 = vadd.f32 %v1605, %v1614
    %v1616 = vadd.f32 %v1615, %v1311
    %v1617 = vadd.f32 %v1590, %v1288
    %v1618 = vadd.f32 %v1597, %v1292
    %v1619 = vmax.f32 %v1617, %v1618
    %v1620 = vsub.f32 %v1617, %v1619
    %v1621 = vmul.f32 %v1620, 1.442695
    %v1622 = vpow.pop %v1621
    %v1623 = vsub.f32 %v1618, %v1619
    %v1624 = vmul.f32 %v1623, 1.442695
    %v1625 = vpow.pop %v1624
    %v1626 = vadd.f32 %v1622, %v1625
    %v1627 = vlog2.pop %v1626
    %v1628 = vmul.f32 %v1627, 0.6931472
    %v1629 = vadd.f32 %v1619, %v1628
    %v1630 = vadd.f32 %v1629, %v1328
    %v1632 = vrot.slane %v1616, 7
    %v1635 = vrot.slane %v1590, 7
    %v1637 = vsel %vm1331, %v1632, %v1635
    %v1639 = vrot.slane %v1630, 7
    %v1642 = vrot.slane %v1597, 7
    %v1644 = vsel %vm1331, %v1639, %v1642
    %v1645 = vrot.slane %v1363, 6
    %v1647 = vadd.f32 %v1600, %v1645
    %v1648 = vrot.slane %v1602, 7
    %v1649 = vsel %vm1331, %v1276, %v1648
    %vm1650 = vcmp.eq.s32.totalorder %v1649, 1
    %v1651 = vsel %vm1650, %v1284, %v1282
    %v1653 = vrot.slane %v1651, 7
    %v1655 = vadd.f32 %v1647, %v1653
    %v1656 = vadd.f32 %v1637, %v1282
    %v1657 = vadd.f32 %v1644, %v1284
    %v1658 = vmax.f32 %v1656, %v1657
    %v1659 = vsub.f32 %v1656, %v1658
    %v1660 = vmul.f32 %v1659, 1.442695
    %v1661 = vpow.pop %v1660
    %v1662 = vsub.f32 %v1657, %v1658
    %v1663 = vmul.f32 %v1662, 1.442695
    %v1664 = vpow.pop %v1663
    %v1665 = vadd.f32 %v1661, %v1664
    %v1666 = vlog2.pop %v1665
    %v1667 = vmul.f32 %v1666, 0.6931472
    %v1668 = vadd.f32 %v1658, %v1667
    %v1670 = vrot.slane %v1655, 1
    %v1672 = vsub.f32 %v1668, %v1670
    %v1674 = vrot.slane %v1672, 7
    %vm1676 = vcmask 8192
    %v1677 = vsel %vm1676, %v1674, 0.0
    %1678 = vadd.xlane.f32.xlu0 %v1677
    %v1679 = vpop.xlane.xlu0 %1678
    %v1680 = vrot.slane %v1679, 4
    %v1681 = vadd.f32 %v1679, %v1680
    %v1682 = vrot.slane %v1681, 2
    %v1683 = vadd.f32 %v1681, %v1682
    %v1684 = vrot.slane %v1683, 1
    %v1685 = vadd.f32 %v1683, %v1684
    %s1686 = vtos %v1685
    %v1687 = vstv %s1686
    %vm1688 = vcmask 0
    %1689 = vst.msk [vmem:[#allocation5] sm:$0x1] %vm1688, %v1687
    // Predicated region
    $region38: #{spanbert_crf_forward.1} parent=1 // pred_check
      _
    $region39: #{spanbert_crf_forward.1} parent=1 // pred_check_branch
      %1691 = sbr.rel (0) target = $region41
    $region40: #{spanbert_crf_forward.1} parent=1 // pred_region
      %s1693 = ssub.s32 16, 16
      %1694 = vsyncadd [#allocation3], %s1693
      %s1696 = sshll.u32 [#allocation5], 4
      %s1697 = int_to_ptr.vmem [resolvable:$true] %s1696
      %1699 = dma.vmem_to_hbm [thread:$0]  %s1697, 16, %s8, [#allocation3]
    $region41: #{spanbert_crf_forward.1} parent=1 // pred_fallthru
      _
    // Predicated region
    $region42: #{spanbert_crf_forward.1} parent=1 // pred_check
      _
    $region43: #{spanbert_crf_forward.1} parent=1 // pred_check_branch
      %1701 = sbr.rel (0) target = $region45
    $region44: #{spanbert_crf_forward.1} parent=1 // pred_region
      %1702 = dma.done [#allocation3], 16
    $region45: #{spanbert_crf_forward.1} parent=1 // pred_fallthru
      _
    %1703 = vsyncpa [#allocation3], 1
    %1704 = vsyncpa [#allocation4], 1

</llo_original>
